<compile_context>
chip_gen: v7x
topology: tpu7x:2x2x1
jax: 0.10.0
libtpu: 0.0.40
codegen_flags: <defaults>
</compile_context>

<pallas_src>
import math

import jax
import jax.numpy as jnp
import numpy as np
from jax.experimental import pallas as pl
from jax.experimental.pallas import tpu as pltpu

IN_DIM = 33        # SRRN input_dim
HID = 256          # SRRN hidden_dim
ROW_TILE = 2048    # rows per grid step (multiple of 256; ~16-20 MiB live at peak)


def _act_dtype_for_device():
    """bf16 inter-layer activations only on chips with a native bf16 VPU (v6e/v7x)."""
    try:
        kind = jax.devices()[0].device_kind.lower()
    except Exception:
        return jnp.float32
    if any(tag in kind for tag in ("v2", "v3", "v4", "v5")):
        return jnp.float32
    return jnp.bfloat16


# ----------------------------------------------------------------------------
# Pallas kernel factory: fused MLP forward for one tile of rows.
# ----------------------------------------------------------------------------
def make_srrn_kernel(act_dtype):
    f32 = jnp.float32
    bf16 = jnp.bfloat16

    def srrn_kernel(x_ref,
                    w0_ref, b0_ref,
                    w2_ref, b2_ref,
                    w4a_ref, w4b_ref, b4_ref,
                    w6_ref, b6_ref,
                    w8_ref, b8_ref,
                    we_ref, be_ref,
                    w10_ref, b10_ref,
                    w11_ref, b11_ref,
                    w13_ref, b13_ref,
                    wt_ref, bt_ref,
                    o_ref):

        def dense(h, w_ref, b_ref):
            # bf16 operands on the MXU, f32 accumulation; then a single cast to
            # the activation dtype and a bias add in that dtype.
            acc = jnp.dot(h.astype(bf16), w_ref[...], preferred_element_type=f32)
            return acc.astype(act_dtype) + b_ref[...]

        # Hoisted input cast: one bf16 copy of x reused for layer 0 and the skip.
        x_bf = x_ref[...].astype(bf16)                     # (TN, 33)
        xr_bf = jnp.maximum(x_bf, 0.0)                     # relu(inputs) for the skip

        # layers[0] Linear(33,256) + layers[1] ReLU
        h = jnp.maximum(dense(x_bf, w0_ref, b0_ref), 0.0)
        # layers[2] Linear(256,256); layers[3] ReLU applies to cat([h, x]):
        # relu(cat([h, x])) == cat(relu(h), relu(x))
        h = jnp.maximum(dense(h, w2_ref, b2_ref), 0.0)
        # layers[4] Linear(289,256) split along its input axis (no concat):
        acc4 = (jnp.dot(h.astype(bf16), w4a_ref[...], preferred_element_type=f32)
                + jnp.dot(xr_bf, w4b_ref[...], preferred_element_type=f32))
        h = jnp.maximum(acc4.astype(act_dtype) + b4_ref[...], 0.0)   # layers[5] ReLU
        h = jnp.maximum(dense(h, w6_ref, b6_ref), 0.0)     # layers[6..7]
        h = jnp.maximum(dense(h, w8_ref, b8_ref), 0.0)     # layers[8..9]
        h = jnp.maximum(dense(h, we_ref, be_ref), 0.0)     # emissivity_layer + relu
        h = dense(h, w10_ref, b10_ref)                     # layers[10] (no relu)
        h = jnp.maximum(dense(h, w11_ref, b11_ref), 0.0)   # layers[11..12] (256->128)
        h = jnp.maximum(dense(h, w13_ref, b13_ref), 0.0)   # layers[13..14] (128->64)
        # temperature_layer Linear(64,1) + relu: f32 multiply + lane reduce.
        t = jnp.sum(h.astype(f32) * wt_ref[...], axis=-1, keepdims=True) + bt_ref[...]
        o_ref[...] = jnp.maximum(t, 0.0)

    return srrn_kernel


# ----------------------------------------------------------------------------
# Parameter construction (deterministic, PyTorch-Linear-style uniform init).
# ----------------------------------------------------------------------------
def linear_init(key, fan_in, fan_out):
    kw, kb = jax.random.split(key)
    bound = 1.0 / math.sqrt(fan_in)
    w = jax.random.uniform(kw, (fan_in, fan_out), jnp.float32, -bound, bound)
    b = jax.random.uniform(kb, (fan_out,), jnp.float32, -bound, bound)
    return w, b


def init_srrn_params(key):
    ks = jax.random.split(key, 11)
    W0, b0 = linear_init(ks[0], IN_DIM, HID)        # layers[0]
    W2, b2 = linear_init(ks[1], HID, HID)           # layers[2]
    W4, b4 = linear_init(ks[2], HID + IN_DIM, HID)  # layers[4] (skip concat)
    W6, b6 = linear_init(ks[3], HID, HID)           # layers[6]
    W8, b8 = linear_init(ks[4], HID, HID)           # layers[8]
    We, be = linear_init(ks[5], HID, HID)           # emissivity_layer
    W10, b10 = linear_init(ks[6], HID, HID)         # layers[10]
    W11, b11 = linear_init(ks[7], HID, 128)         # layers[11]
    W13, b13 = linear_init(ks[8], 128, 64)          # layers[13]
    Wt, bt = linear_init(ks[9], 64, 1)              # temperature_layer
    return (W0, b0, W2, b2, W4, b4, W6, b6, W8, b8,
            We, be, W10, b10, W11, b11, W13, b13, Wt, bt)


def pack_params_for_kernel(params, act_dtype):
    (W0, b0, W2, b2, W4, b4, W6, b6, W8, b8,
     We, be, W10, b10, W11, b11, W13, b13, Wt, bt) = params
    bf16 = jnp.bfloat16

    # cat order is [h, inputs]: first 256 input features multiply h, last 33 the raw x.
    W4a = W4[:HID, :]        # hidden part of the skip layer (256, 256)
    W4b = W4[HID:, :]        # raw-input part of the skip layer (33, 256)

    def b_(b, n):
        return b.reshape(1, n).astype(act_dtype)

    packed = [
        W0.astype(bf16), b_(b0, HID),
        W2.astype(bf16), b_(b2, HID),
        W4a.astype(bf16), W4b.astype(bf16), b_(b4, HID),
        W6.astype(bf16), b_(b6, HID),
        W8.astype(bf16), b_(b8, HID),
        We.astype(bf16), b_(be, HID),
        W10.astype(bf16), b_(b10, HID),
        W11.astype(bf16), b_(b11, 128),
        W13.astype(bf16), b_(b13, 64),
        Wt.reshape(1, 64).astype(jnp.float32),      # final layer kept in f32
        bt.reshape(1, 1).astype(jnp.float32),
    ]
    return packed


# ----------------------------------------------------------------------------
# Wrapper: tile rows, call the kernel, reshape the (rows, 1) output.
# ----------------------------------------------------------------------------
def srrn_pallas(x, params):
    lead_shape = x.shape[:-1]
    assert x.shape[-1] == IN_DIM
    act_dtype = _act_dtype_for_device()

    x2d = x.reshape(-1, IN_DIM).astype(jnp.float32)
    n = x2d.shape[0]

    tn = ROW_TILE
    if n <= tn:
        # Small inputs: split into (up to) two tiles so both v7x TensorCores get
        # a grid step under dimension_semantics=("parallel",).
        half = -(-n // 2)
        tn = max(8, -(-half // 8) * 8)
    n_pad = -(-n // tn) * tn
    if n_pad != n:
        x2d = jnp.pad(x2d, ((0, n_pad - n), (0, 0)))

    packed = pack_params_for_kernel(params, act_dtype)
    # Weights/biases: full-array blocks with a constant index_map -> fetched once,
    # stay resident in VMEM across all row tiles.
    param_specs = [pl.BlockSpec(p.shape, lambda i: (0, 0)) for p in packed]

    out = pl.pallas_call(
        make_srrn_kernel(act_dtype),
        out_shape=jax.ShapeDtypeStruct((n_pad, 1), jnp.float32),
        grid_spec=pltpu.PrefetchScalarGridSpec(
            num_scalar_prefetch=0,
            grid=(n_pad // tn,),
            in_specs=[pl.BlockSpec((tn, IN_DIM), lambda i: (i, 0))] + param_specs,
            out_specs=pl.BlockSpec((tn, 1), lambda i: (i, 0)),
        ),
        compiler_params=pltpu.CompilerParams(
            dimension_semantics=("parallel",),        # row tiles are independent
            vmem_limit_bytes=32 * 1024 * 1024,        # fits v7x's 64 MiB physical VMEM
        ),
    )(x2d, *packed)

    return out[:n].reshape(*lead_shape, 1)


# ----------------------------------------------------------------------------
# Pure-JAX reference mirroring the kernel's mixed precision exactly
# (bf16 MXU operands, f32 accumulation, bias/ReLU in `act_dtype`).
# With act_dtype=f32 it matches the original PyTorch module up to bf16 matmuls.
# ----------------------------------------------------------------------------
def srrn_reference(x, params, act_dtype=jnp.float32):
    (W0, b0, W2, b2, W4, b4, W6, b6, W8, b8,
     We, be, W10, b10, W11, b11, W13, b13, Wt, bt) = params
    f32, bf16 = jnp.float32, jnp.bfloat16

    def lin(h, w, b):
        acc = jnp.dot(h.astype(bf16), w.astype(bf16), preferred_element_type=f32)
        return acc.astype(act_dtype) + b.astype(act_dtype)

    inputs = x.astype(f32)
    h = jax.nn.relu(lin(inputs, W0, b0))                        # layers[0..1]
    h = lin(h, W2, b2)                                          # layers[2]
    h = jax.nn.relu(jnp.concatenate([h.astype(f32), inputs], axis=-1))  # skip cat + ReLU
    h = jax.nn.relu(lin(h, W4, b4))                             # layers[4..5]
    h = jax.nn.relu(lin(h, W6, b6))                             # layers[6..7]
    h = jax.nn.relu(lin(h, W8, b8))                             # layers[8..9]
    h = jax.nn.relu(lin(h, We, be))                             # emissivity + relu
    h = lin(h, W10, b10)                                        # layers[10]
    h = jax.nn.relu(lin(h, W11, b11))                           # layers[11..12]
    h = jax.nn.relu(lin(h, W13, b13))                           # layers[13..14]
    # final layer stays f32 (kernel also keeps it in f32)
    return jax.nn.relu(jnp.dot(h.astype(f32), Wt, preferred_element_type=f32) + bt)


if __name__ == "__main__":
    key = jax.random.PRNGKey(0)
    kp, kx = jax.random.split(key)
    params = init_srrn_params(kp)

    # small input: batch=2, seq=8, features=33 (module's input_dim)
    x = jax.random.normal(kx, (2, 8, IN_DIM), jnp.float32)

    fwd = jax.jit(srrn_pallas)
    out = jax.block_until_ready(fwd(x, params))

    # validate against a reference with the same precision chain as the kernel
    act_dtype = _act_dtype_for_device()
    ref = srrn_reference(x.reshape(-1, IN_DIM), params,
                         act_dtype=act_dtype).reshape(2, 8, 1)

    assert out.shape == (2, 8, 1), out.shape
    assert np.allclose(np.asarray(out), np.asarray(ref), atol=2e-2, rtol=2e-2), (
        "mismatch vs reference")
    print("KERNEL_OK")
</pallas_src>

<mosaic_0001>
module attributes {stable_mosaic.version = 11 : i64} {
  func.func @srrn_kernel(%arg0: i32, %arg1: memref<8x33xf32, #tpu.memory_space<vmem>>, %arg2: memref<33x256xbf16, #tpu.memory_space<vmem>>, %arg3: memref<1x256xbf16, #tpu.memory_space<vmem>>, %arg4: memref<256x256xbf16, #tpu.memory_space<vmem>>, %arg5: memref<1x256xbf16, #tpu.memory_space<vmem>>, %arg6: memref<256x256xbf16, #tpu.memory_space<vmem>>, %arg7: memref<33x256xbf16, #tpu.memory_space<vmem>>, %arg8: memref<1x256xbf16, #tpu.memory_space<vmem>>, %arg9: memref<256x256xbf16, #tpu.memory_space<vmem>>, %arg10: memref<1x256xbf16, #tpu.memory_space<vmem>>, %arg11: memref<256x256xbf16, #tpu.memory_space<vmem>>, %arg12: memref<1x256xbf16, #tpu.memory_space<vmem>>, %arg13: memref<256x256xbf16, #tpu.memory_space<vmem>>, %arg14: memref<1x256xbf16, #tpu.memory_space<vmem>>, %arg15: memref<256x256xbf16, #tpu.memory_space<vmem>>, %arg16: memref<1x256xbf16, #tpu.memory_space<vmem>>, %arg17: memref<256x128xbf16, #tpu.memory_space<vmem>>, %arg18: memref<1x128xbf16, #tpu.memory_space<vmem>>, %arg19: memref<128x64xbf16, #tpu.memory_space<vmem>>, %arg20: memref<1x64xbf16, #tpu.memory_space<vmem>>, %arg21: memref<1x64xf32, #tpu.memory_space<vmem>>, %arg22: memref<1x1xf32, #tpu.memory_space<vmem>>, %arg23: memref<8x1xf32, #tpu.memory_space<vmem>>) attributes {dimension_semantics = [#tpu.dimension_semantics<parallel>], iteration_bounds = array<i64: 2>, scalar_prefetch = 0 : i64, scratch_operands = 0 : i64, tpu.core_type = #tpu.core_type<tc>, window_params = [{transform_indices = @transform_0, window_bounds = array<i64: 8, 33>}, {pipeline_mode = #tpu.pipeline_mode<synchronous>, transform_indices = @transform_1, window_bounds = array<i64: 33, 256>}, {pipeline_mode = #tpu.pipeline_mode<synchronous>, transform_indices = @transform_2, window_bounds = array<i64: 1, 256>}, {pipeline_mode = #tpu.pipeline_mode<synchronous>, transform_indices = @transform_3, window_bounds = array<i64: 256, 256>}, {pipeline_mode = #tpu.pipeline_mode<synchronous>, transform_indices = @transform_4, window_bounds = array<i64: 1, 256>}, {pipeline_mode = #tpu.pipeline_mode<synchronous>, transform_indices = @transform_5, window_bounds = array<i64: 256, 256>}, {pipeline_mode = #tpu.pipeline_mode<synchronous>, transform_indices = @transform_6, window_bounds = array<i64: 33, 256>}, {pipeline_mode = #tpu.pipeline_mode<synchronous>, transform_indices = @transform_7, window_bounds = array<i64: 1, 256>}, {pipeline_mode = #tpu.pipeline_mode<synchronous>, transform_indices = @transform_8, window_bounds = array<i64: 256, 256>}, {pipeline_mode = #tpu.pipeline_mode<synchronous>, transform_indices = @transform_9, window_bounds = array<i64: 1, 256>}, {pipeline_mode = #tpu.pipeline_mode<synchronous>, transform_indices = @transform_10, window_bounds = array<i64: 256, 256>}, {pipeline_mode = #tpu.pipeline_mode<synchronous>, transform_indices = @transform_11, window_bounds = array<i64: 1, 256>}, {pipeline_mode = #tpu.pipeline_mode<synchronous>, transform_indices = @transform_12, window_bounds = array<i64: 256, 256>}, {pipeline_mode = #tpu.pipeline_mode<synchronous>, transform_indices = @transform_13, window_bounds = array<i64: 1, 256>}, {pipeline_mode = #tpu.pipeline_mode<synchronous>, transform_indices = @transform_14, window_bounds = array<i64: 256, 256>}, {pipeline_mode = #tpu.pipeline_mode<synchronous>, transform_indices = @transform_15, window_bounds = array<i64: 1, 256>}, {pipeline_mode = #tpu.pipeline_mode<synchronous>, transform_indices = @transform_16, window_bounds = array<i64: 256, 128>}, {pipeline_mode = #tpu.pipeline_mode<synchronous>, transform_indices = @transform_17, window_bounds = array<i64: 1, 128>}, {pipeline_mode = #tpu.pipeline_mode<synchronous>, transform_indices = @transform_18, window_bounds = array<i64: 128, 64>}, {pipeline_mode = #tpu.pipeline_mode<synchronous>, transform_indices = @transform_19, window_bounds = array<i64: 1, 64>}, {pipeline_mode = #tpu.pipeline_mode<synchronous>, transform_indices = @transform_20, window_bounds = array<i64: 1, 64>}, {pipeline_mode = #tpu.pipeline_mode<synchronous>, transform_indices = @transform_21, window_bounds = array<i64: 1, 1>}, {transform_indices = @transform_22, window_bounds = array<i64: 8, 1>}]} {
    %c0 = arith.constant 0 : index
    %c0_0 = arith.constant 0 : index
    %0 = vector.load %arg1[%c0, %c0_0] : memref<8x33xf32, #tpu.memory_space<vmem>>, vector<8x33xf32>
    %1 = arith.truncf %0 : vector<8x33xf32> to vector<8x33xbf16>
    %cst = arith.constant 0.000000e+00 : bf16
    %2 = vector.broadcast %cst : bf16 to vector<8x33xbf16>
    %3 = arith.maximumf %1, %2 : vector<8x33xbf16>
    %c0_1 = arith.constant 0 : index
    %c0_2 = arith.constant 0 : index
    %4 = vector.load %arg2[%c0_1, %c0_2] : memref<33x256xbf16, #tpu.memory_space<vmem>>, vector<33x256xbf16>
    %cst_3 = arith.constant dense<0.000000e+00> : vector<8x256xf32>
    %5 = tpu.matmul %1, %4, %cst_3 {dimension_numbers = #tpu.dot_dimension_numbers<[1], [0], [0], [1], [0, 0, 1, 1], [], []>} : vector<8x33xbf16>, vector<33x256xbf16>, vector<8x256xf32> -> vector<8x256xf32>
    %6 = arith.truncf %5 : vector<8x256xf32> to vector<8x256xbf16>
    %c0_4 = arith.constant 0 : index
    %c0_5 = arith.constant 0 : index
    %7 = vector.load %arg3[%c0_4, %c0_5] : memref<1x256xbf16, #tpu.memory_space<vmem>>, vector<1x256xbf16>
    %8 = vector.broadcast %7 : vector<1x256xbf16> to vector<8x256xbf16>
    %9 = arith.addf %6, %8 : vector<8x256xbf16>
    %cst_6 = arith.constant 0.000000e+00 : bf16
    %10 = vector.broadcast %cst_6 : bf16 to vector<8x256xbf16>
    %11 = arith.maximumf %9, %10 : vector<8x256xbf16>
    %c0_7 = arith.constant 0 : index
    %c0_8 = arith.constant 0 : index
    %12 = vector.load %arg4[%c0_7, %c0_8] : memref<256x256xbf16, #tpu.memory_space<vmem>>, vector<256x256xbf16>
    %cst_9 = arith.constant dense<0.000000e+00> : vector<8x256xf32>
    %13 = tpu.matmul %11, %12, %cst_9 {dimension_numbers = #tpu.dot_dimension_numbers<[1], [0], [0], [1], [0, 0, 1, 1], [], []>} : vector<8x256xbf16>, vector<256x256xbf16>, vector<8x256xf32> -> vector<8x256xf32>
    %14 = arith.truncf %13 : vector<8x256xf32> to vector<8x256xbf16>
    %c0_10 = arith.constant 0 : index
    %c0_11 = arith.constant 0 : index
    %15 = vector.load %arg5[%c0_10, %c0_11] : memref<1x256xbf16, #tpu.memory_space<vmem>>, vector<1x256xbf16>
    %16 = vector.broadcast %15 : vector<1x256xbf16> to vector<8x256xbf16>
    %17 = arith.addf %14, %16 : vector<8x256xbf16>
    %cst_12 = arith.constant 0.000000e+00 : bf16
    %18 = vector.broadcast %cst_12 : bf16 to vector<8x256xbf16>
    %19 = arith.maximumf %17, %18 : vector<8x256xbf16>
    %c0_13 = arith.constant 0 : index
    %c0_14 = arith.constant 0 : index
    %20 = vector.load %arg6[%c0_13, %c0_14] : memref<256x256xbf16, #tpu.memory_space<vmem>>, vector<256x256xbf16>
    %cst_15 = arith.constant dense<0.000000e+00> : vector<8x256xf32>
    %21 = tpu.matmul %19, %20, %cst_15 {dimension_numbers = #tpu.dot_dimension_numbers<[1], [0], [0], [1], [0, 0, 1, 1], [], []>} : vector<8x256xbf16>, vector<256x256xbf16>, vector<8x256xf32> -> vector<8x256xf32>
    %c0_16 = arith.constant 0 : index
    %c0_17 = arith.constant 0 : index
    %22 = vector.load %arg7[%c0_16, %c0_17] : memref<33x256xbf16, #tpu.memory_space<vmem>>, vector<33x256xbf16>
    %cst_18 = arith.constant dense<0.000000e+00> : vector<8x256xf32>
    %23 = tpu.matmul %3, %22, %cst_18 {dimension_numbers = #tpu.dot_dimension_numbers<[1], [0], [0], [1], [0, 0, 1, 1], [], []>} : vector<8x33xbf16>, vector<33x256xbf16>, vector<8x256xf32> -> vector<8x256xf32>
    %24 = arith.addf %21, %23 : vector<8x256xf32>
    %25 = arith.truncf %24 : vector<8x256xf32> to vector<8x256xbf16>
    %c0_19 = arith.constant 0 : index
    %c0_20 = arith.constant 0 : index
    %26 = vector.load %arg8[%c0_19, %c0_20] : memref<1x256xbf16, #tpu.memory_space<vmem>>, vector<1x256xbf16>
    %27 = vector.broadcast %26 : vector<1x256xbf16> to vector<8x256xbf16>
    %28 = arith.addf %25, %27 : vector<8x256xbf16>
    %cst_21 = arith.constant 0.000000e+00 : bf16
    %29 = vector.broadcast %cst_21 : bf16 to vector<8x256xbf16>
    %30 = arith.maximumf %28, %29 : vector<8x256xbf16>
    %c0_22 = arith.constant 0 : index
    %c0_23 = arith.constant 0 : index
    %31 = vector.load %arg9[%c0_22, %c0_23] : memref<256x256xbf16, #tpu.memory_space<vmem>>, vector<256x256xbf16>
    %cst_24 = arith.constant dense<0.000000e+00> : vector<8x256xf32>
    %32 = tpu.matmul %30, %31, %cst_24 {dimension_numbers = #tpu.dot_dimension_numbers<[1], [0], [0], [1], [0, 0, 1, 1], [], []>} : vector<8x256xbf16>, vector<256x256xbf16>, vector<8x256xf32> -> vector<8x256xf32>
    %33 = arith.truncf %32 : vector<8x256xf32> to vector<8x256xbf16>
    %c0_25 = arith.constant 0 : index
    %c0_26 = arith.constant 0 : index
    %34 = vector.load %arg10[%c0_25, %c0_26] : memref<1x256xbf16, #tpu.memory_space<vmem>>, vector<1x256xbf16>
    %35 = vector.broadcast %34 : vector<1x256xbf16> to vector<8x256xbf16>
    %36 = arith.addf %33, %35 : vector<8x256xbf16>
    %cst_27 = arith.constant 0.000000e+00 : bf16
    %37 = vector.broadcast %cst_27 : bf16 to vector<8x256xbf16>
    %38 = arith.maximumf %36, %37 : vector<8x256xbf16>
    %c0_28 = arith.constant 0 : index
    %c0_29 = arith.constant 0 : index
    %39 = vector.load %arg11[%c0_28, %c0_29] : memref<256x256xbf16, #tpu.memory_space<vmem>>, vector<256x256xbf16>
    %cst_30 = arith.constant dense<0.000000e+00> : vector<8x256xf32>
    %40 = tpu.matmul %38, %39, %cst_30 {dimension_numbers = #tpu.dot_dimension_numbers<[1], [0], [0], [1], [0, 0, 1, 1], [], []>} : vector<8x256xbf16>, vector<256x256xbf16>, vector<8x256xf32> -> vector<8x256xf32>
    %41 = arith.truncf %40 : vector<8x256xf32> to vector<8x256xbf16>
    %c0_31 = arith.constant 0 : index
    %c0_32 = arith.constant 0 : index
    %42 = vector.load %arg12[%c0_31, %c0_32] : memref<1x256xbf16, #tpu.memory_space<vmem>>, vector<1x256xbf16>
    %43 = vector.broadcast %42 : vector<1x256xbf16> to vector<8x256xbf16>
    %44 = arith.addf %41, %43 : vector<8x256xbf16>
    %cst_33 = arith.constant 0.000000e+00 : bf16
    %45 = vector.broadcast %cst_33 : bf16 to vector<8x256xbf16>
    %46 = arith.maximumf %44, %45 : vector<8x256xbf16>
    %c0_34 = arith.constant 0 : index
    %c0_35 = arith.constant 0 : index
    %47 = vector.load %arg13[%c0_34, %c0_35] : memref<256x256xbf16, #tpu.memory_space<vmem>>, vector<256x256xbf16>
    %cst_36 = arith.constant dense<0.000000e+00> : vector<8x256xf32>
    %48 = tpu.matmul %46, %47, %cst_36 {dimension_numbers = #tpu.dot_dimension_numbers<[1], [0], [0], [1], [0, 0, 1, 1], [], []>} : vector<8x256xbf16>, vector<256x256xbf16>, vector<8x256xf32> -> vector<8x256xf32>
    %49 = arith.truncf %48 : vector<8x256xf32> to vector<8x256xbf16>
    %c0_37 = arith.constant 0 : index
    %c0_38 = arith.constant 0 : index
    %50 = vector.load %arg14[%c0_37, %c0_38] : memref<1x256xbf16, #tpu.memory_space<vmem>>, vector<1x256xbf16>
    %51 = vector.broadcast %50 : vector<1x256xbf16> to vector<8x256xbf16>
    %52 = arith.addf %49, %51 : vector<8x256xbf16>
    %cst_39 = arith.constant 0.000000e+00 : bf16
    %53 = vector.broadcast %cst_39 : bf16 to vector<8x256xbf16>
    %54 = arith.maximumf %52, %53 : vector<8x256xbf16>
    %c0_40 = arith.constant 0 : index
    %c0_41 = arith.constant 0 : index
    %55 = vector.load %arg15[%c0_40, %c0_41] : memref<256x256xbf16, #tpu.memory_space<vmem>>, vector<256x256xbf16>
    %cst_42 = arith.constant dense<0.000000e+00> : vector<8x256xf32>
    %56 = tpu.matmul %54, %55, %cst_42 {dimension_numbers = #tpu.dot_dimension_numbers<[1], [0], [0], [1], [0, 0, 1, 1], [], []>} : vector<8x256xbf16>, vector<256x256xbf16>, vector<8x256xf32> -> vector<8x256xf32>
    %57 = arith.truncf %56 : vector<8x256xf32> to vector<8x256xbf16>
    %c0_43 = arith.constant 0 : index
    %c0_44 = arith.constant 0 : index
    %58 = vector.load %arg16[%c0_43, %c0_44] : memref<1x256xbf16, #tpu.memory_space<vmem>>, vector<1x256xbf16>
    %59 = vector.broadcast %58 : vector<1x256xbf16> to vector<8x256xbf16>
    %60 = arith.addf %57, %59 : vector<8x256xbf16>
    %c0_45 = arith.constant 0 : index
    %c0_46 = arith.constant 0 : index
    %61 = vector.load %arg17[%c0_45, %c0_46] : memref<256x128xbf16, #tpu.memory_space<vmem>>, vector<256x128xbf16>
    %cst_47 = arith.constant dense<0.000000e+00> : vector<8x128xf32>
    %62 = tpu.matmul %60, %61, %cst_47 {dimension_numbers = #tpu.dot_dimension_numbers<[1], [0], [0], [1], [0, 0, 1, 1], [], []>} : vector<8x256xbf16>, vector<256x128xbf16>, vector<8x128xf32> -> vector<8x128xf32>
    %63 = arith.truncf %62 : vector<8x128xf32> to vector<8x128xbf16>
    %c0_48 = arith.constant 0 : index
    %c0_49 = arith.constant 0 : index
    %64 = vector.load %arg18[%c0_48, %c0_49] : memref<1x128xbf16, #tpu.memory_space<vmem>>, vector<1x128xbf16>
    %65 = vector.broadcast %64 : vector<1x128xbf16> to vector<8x128xbf16>
    %66 = arith.addf %63, %65 : vector<8x128xbf16>
    %cst_50 = arith.constant 0.000000e+00 : bf16
    %67 = vector.broadcast %cst_50 : bf16 to vector<8x128xbf16>
    %68 = arith.maximumf %66, %67 : vector<8x128xbf16>
    %c0_51 = arith.constant 0 : index
    %c0_52 = arith.constant 0 : index
    %69 = vector.load %arg19[%c0_51, %c0_52] : memref<128x64xbf16, #tpu.memory_space<vmem>>, vector<128x64xbf16>
    %cst_53 = arith.constant dense<0.000000e+00> : vector<8x64xf32>
    %70 = tpu.matmul %68, %69, %cst_53 {dimension_numbers = #tpu.dot_dimension_numbers<[1], [0], [0], [1], [0, 0, 1, 1], [], []>} : vector<8x128xbf16>, vector<128x64xbf16>, vector<8x64xf32> -> vector<8x64xf32>
    %71 = arith.truncf %70 : vector<8x64xf32> to vector<8x64xbf16>
    %c0_54 = arith.constant 0 : index
    %c0_55 = arith.constant 0 : index
    %72 = vector.load %arg20[%c0_54, %c0_55] : memref<1x64xbf16, #tpu.memory_space<vmem>>, vector<1x64xbf16>
    %73 = vector.broadcast %72 : vector<1x64xbf16> to vector<8x64xbf16>
    %74 = arith.addf %71, %73 : vector<8x64xbf16>
    %cst_56 = arith.constant 0.000000e+00 : bf16
    %75 = vector.broadcast %cst_56 : bf16 to vector<8x64xbf16>
    %76 = arith.maximumf %74, %75 : vector<8x64xbf16>
    %77 = arith.extf %76 : vector<8x64xbf16> to vector<8x64xf32>
    %c0_57 = arith.constant 0 : index
    %c0_58 = arith.constant 0 : index
    %78 = vector.load %arg21[%c0_57, %c0_58] : memref<1x64xf32, #tpu.memory_space<vmem>>, vector<1x64xf32>
    %79 = vector.broadcast %78 : vector<1x64xf32> to vector<8x64xf32>
    %80 = arith.mulf %77, %79 : vector<8x64xf32>
    %cst_59 = arith.constant dense<0.000000e+00> : vector<8xf32>
    %81 = vector.multi_reduction <add>, %80, %cst_59 [1] : vector<8x64xf32> to vector<8xf32>
    %82 = vector.shape_cast %81 : vector<8xf32> to vector<8x1xf32>
    %c0_60 = arith.constant 0 : index
    %c0_61 = arith.constant 0 : index
    %83 = vector.load %arg22[%c0_60, %c0_61] : memref<1x1xf32, #tpu.memory_space<vmem>>, vector<1x1xf32>
    %84 = vector.broadcast %83 : vector<1x1xf32> to vector<8x1xf32>
    %85 = arith.addf %82, %84 : vector<8x1xf32>
    %cst_62 = arith.constant 0.000000e+00 : f32
    %86 = vector.broadcast %cst_62 : f32 to vector<8x1xf32>
    %87 = arith.maximumf %85, %86 : vector<8x1xf32>
    %c0_63 = arith.constant 0 : index
    %c0_64 = arith.constant 0 : index
    %88 = vector.load %arg23[%c0_63, %c0_64] : memref<8x1xf32, #tpu.memory_space<vmem>>, vector<8x1xf32>
    tpu.vector_store %arg23[%c0_63, %c0_64], %87 {strides = array<i32>} : memref<8x1xf32, #tpu.memory_space<vmem>>, vector<8x1xf32>,
    return
  }
  func.func @transform_0(%arg0: i32) -> (i32, i32) {
    %c0_i32 = arith.constant 0 : i32
    %c0_i32_0 = arith.constant 0 : i32
    return %arg0, %c0_i32 : i32, i32
  }
  func.func @transform_1(%arg0: i32) -> (i32, i32) {
    %c0_i32 = arith.constant 0 : i32
    %c0_i32_0 = arith.constant 0 : i32
    %c0_i32_1 = arith.constant 0 : i32
    return %c0_i32, %c0_i32_0 : i32, i32
  }
  func.func @transform_2(%arg0: i32) -> (i32, i32) {
    %c0_i32 = arith.constant 0 : i32
    %c0_i32_0 = arith.constant 0 : i32
    %c0_i32_1 = arith.constant 0 : i32
    return %c0_i32, %c0_i32_0 : i32, i32
  }
  func.func @transform_3(%arg0: i32) -> (i32, i32) {
    %c0_i32 = arith.constant 0 : i32
    %c0_i32_0 = arith.constant 0 : i32
    %c0_i32_1 = arith.constant 0 : i32
    return %c0_i32, %c0_i32_0 : i32, i32
  }
  func.func @transform_4(%arg0: i32) -> (i32, i32) {
    %c0_i32 = arith.constant 0 : i32
    %c0_i32_0 = arith.constant 0 : i32
    %c0_i32_1 = arith.constant 0 : i32
    return %c0_i32, %c0_i32_0 : i32, i32
  }
  func.func @transform_5(%arg0: i32) -> (i32, i32) {
    %c0_i32 = arith.constant 0 : i32
    %c0_i32_0 = arith.constant 0 : i32
    %c0_i32_1 = arith.constant 0 : i32
    return %c0_i32, %c0_i32_0 : i32, i32
  }
  func.func @transform_6(%arg0: i32) -> (i32, i32) {
    %c0_i32 = arith.constant 0 : i32
    %c0_i32_0 = arith.constant 0 : i32
    %c0_i32_1 = arith.constant 0 : i32
    return %c0_i32, %c0_i32_0 : i32, i32
  }
  func.func @transform_7(%arg0: i32) -> (i32, i32) {
    %c0_i32 = arith.constant 0 : i32
    %c0_i32_0 = arith.constant 0 : i32
    %c0_i32_1 = arith.constant 0 : i32
    return %c0_i32, %c0_i32_0 : i32, i32
  }
  func.func @transform_8(%arg0: i32) -> (i32, i32) {
    %c0_i32 = arith.constant 0 : i32
    %c0_i32_0 = arith.constant 0 : i32
    %c0_i32_1 = arith.constant 0 : i32
    return %c0_i32, %c0_i32_0 : i32, i32
  }
  func.func @transform_9(%arg0: i32) -> (i32, i32) {
    %c0_i32 = arith.constant 0 : i32
    %c0_i32_0 = arith.constant 0 : i32
    %c0_i32_1 = arith.constant 0 : i32
    return %c0_i32, %c0_i32_0 : i32, i32
  }
  func.func @transform_10(%arg0: i32) -> (i32, i32) {
    %c0_i32 = arith.constant 0 : i32
    %c0_i32_0 = arith.constant 0 : i32
    %c0_i32_1 = arith.constant 0 : i32
    return %c0_i32, %c0_i32_0 : i32, i32
  }
  func.func @transform_11(%arg0: i32) -> (i32, i32) {
    %c0_i32 = arith.constant 0 : i32
    %c0_i32_0 = arith.constant 0 : i32
    %c0_i32_1 = arith.constant 0 : i32
    return %c0_i32, %c0_i32_0 : i32, i32
  }
  func.func @transform_12(%arg0: i32) -> (i32, i32) {
    %c0_i32 = arith.constant 0 : i32
    %c0_i32_0 = arith.constant 0 : i32
    %c0_i32_1 = arith.constant 0 : i32
    return %c0_i32, %c0_i32_0 : i32, i32
  }
  func.func @transform_13(%arg0: i32) -> (i32, i32) {
    %c0_i32 = arith.constant 0 : i32
    %c0_i32_0 = arith.constant 0 : i32
    %c0_i32_1 = arith.constant 0 : i32
    return %c0_i32, %c0_i32_0 : i32, i32
  }
  func.func @transform_14(%arg0: i32) -> (i32, i32) {
    %c0_i32 = arith.constant 0 : i32
    %c0_i32_0 = arith.constant 0 : i32
    %c0_i32_1 = arith.constant 0 : i32
    return %c0_i32, %c0_i32_0 : i32, i32
  }
  func.func @transform_15(%arg0: i32) -> (i32, i32) {
    %c0_i32 = arith.constant 0 : i32
    %c0_i32_0 = arith.constant 0 : i32
    %c0_i32_1 = arith.constant 0 : i32
    return %c0_i32, %c0_i32_0 : i32, i32
  }
  func.func @transform_16(%arg0: i32) -> (i32, i32) {
    %c0_i32 = arith.constant 0 : i32
    %c0_i32_0 = arith.constant 0 : i32
    %c0_i32_1 = arith.constant 0 : i32
    return %c0_i32, %c0_i32_0 : i32, i32
  }
  func.func @transform_17(%arg0: i32) -> (i32, i32) {
    %c0_i32 = arith.constant 0 : i32
    %c0_i32_0 = arith.constant 0 : i32
    %c0_i32_1 = arith.constant 0 : i32
    return %c0_i32, %c0_i32_0 : i32, i32
  }
  func.func @transform_18(%arg0: i32) -> (i32, i32) {
    %c0_i32 = arith.constant 0 : i32
    %c0_i32_0 = arith.constant 0 : i32
    %c0_i32_1 = arith.constant 0 : i32
    return %c0_i32, %c0_i32_0 : i32, i32
  }
  func.func @transform_19(%arg0: i32) -> (i32, i32) {
    %c0_i32 = arith.constant 0 : i32
    %c0_i32_0 = arith.constant 0 : i32
    %c0_i32_1 = arith.constant 0 : i32
    return %c0_i32, %c0_i32_0 : i32, i32
  }
  func.func @transform_20(%arg0: i32) -> (i32, i32) {
    %c0_i32 = arith.constant 0 : i32
    %c0_i32_0 = arith.constant 0 : i32
    %c0_i32_1 = arith.constant 0 : i32
    return %c0_i32, %c0_i32_0 : i32, i32
  }
  func.func @transform_21(%arg0: i32) -> (i32, i32) {
    %c0_i32 = arith.constant 0 : i32
    %c0_i32_0 = arith.constant 0 : i32
    %c0_i32_1 = arith.constant 0 : i32
    return %c0_i32, %c0_i32_0 : i32, i32
  }
  func.func @transform_22(%arg0: i32) -> (i32, i32) {
    %c0_i32 = arith.constant 0 : i32
    %c0_i32_0 = arith.constant 0 : i32
    return %arg0, %c0_i32 : i32, i32
  }
}

</mosaic_0001>

<llo_original>
// kernel: srrn_pallas.1
$region0: #{srrn_pallas.1}
  #allocation0 [shape = 'u32[]', space=smem, size = 0x4, offset = 0x4, fixed_abs, tag = 'smem constant byte address 0x4 - core index']
  #allocation1 [shape = 'u32[144,128]{1,0:T(1,128)}', space=vmem, size = 0x12000, scoped, tag = 'internal scratch']
  #allocation2 [shape = 'f32[1,1]{1,0:T(1,128)S(1)}', space=vmem, size = 0x200, scoped, tag = 'scoped memory for srrn_pallas.1']
  %s0 = inlined_call_operand.vmem [shape: f32[16,33], index: 0, kind: input, shape index: {}]
  %s1 = inlined_call_operand.vmem [shape: bf16[33,256], index: 1, kind: input, shape index: {}]
  %s2 = inlined_call_operand.vmem [shape: bf16[1,256], index: 2, kind: input, shape index: {}]
  %s3 = inlined_call_operand.vmem [shape: bf16[256,256], index: 3, kind: input, shape index: {}]
  %s4 = inlined_call_operand.vmem [shape: bf16[1,256], index: 4, kind: input, shape index: {}]
  %s5 = inlined_call_operand.vmem [shape: bf16[256,256], index: 5, kind: input, shape index: {}]
  %s6 = inlined_call_operand.vmem [shape: bf16[33,256], index: 6, kind: input, shape index: {}]
  %s7 = inlined_call_operand.vmem [shape: bf16[1,256], index: 7, kind: input, shape index: {}]
  %s8 = inlined_call_operand.vmem [shape: bf16[256,256], index: 8, kind: input, shape index: {}]
  %s9 = inlined_call_operand.vmem [shape: bf16[1,256], index: 9, kind: input, shape index: {}]
  %s10 = inlined_call_operand.vmem [shape: bf16[256,256], index: 10, kind: input, shape index: {}]
  %s11 = inlined_call_operand.vmem [shape: bf16[1,256], index: 11, kind: input, shape index: {}]
  %s12 = inlined_call_operand.vmem [shape: bf16[256,256], index: 12, kind: input, shape index: {}]
  %s13 = inlined_call_operand.vmem [shape: bf16[1,256], index: 13, kind: input, shape index: {}]
  %s14 = inlined_call_operand.vmem [shape: bf16[256,256], index: 14, kind: input, shape index: {}]
  %s15 = inlined_call_operand.vmem [shape: bf16[1,256], index: 15, kind: input, shape index: {}]
  %s16 = inlined_call_operand.vmem [shape: bf16[256,128], index: 16, kind: input, shape index: {}]
  %s17 = inlined_call_operand.vmem [shape: bf16[1,128], index: 17, kind: input, shape index: {}]
  %s18 = inlined_call_operand.vmem [shape: bf16[128,64], index: 18, kind: input, shape index: {}]
  %s19 = inlined_call_operand.vmem [shape: bf16[1,64], index: 19, kind: input, shape index: {}]
  %s20 = inlined_call_operand.vmem [shape: f32[1,64], index: 20, kind: input, shape index: {}]
  %s21 = inlined_call_operand.<no memory space> [shape: f32[1,1], index: 21, kind: input, shape index: {}]
  %s22 = inlined_call_operand.vmem [shape: f32[16,1], index: 22, kind: output, shape index: {}]
  %s23 = sld [smem:[#allocation0]]
  $region121: #{srrn_pallas.1} parent=0
    _
  %s25 = ssub.s32 1, %s23
  %s26 = scalar_select 0, %s25, %s23
  %v27 = vstv %s21
  %28 = vst [vmem:[#allocation2] sm:$0x1] %v27
  loop: start=0, step=1, limit=4
  $region2: #{srrn_pallas.1} parent=0 // loop_pre_header
    _
  $region3: #{srrn_pallas.1} parent=0 // loop_header
    %s30 = sphi 0, %s34
    %p31 = scmp.ge.s32.totalorder %s30, 4
    %s40 = sphi 0, %s42
    %s43 = sphi 0, %s40
    %s44 = sphi 0, %s43
    %s60 = sphi 0, %s44
    %s64 = sphi 0, %s64
    %s66 = sphi 0, %s64
    %s67 = sphi 0, %s66
    %s81 = sphi 0, %s67
    %s85 = sphi 0, %s85
    %s87 = sphi 0, %s85
    %s88 = sphi 0, %s87
    %s102 = sphi 0, %s88
    %s106 = sphi 0, %s106
    %s108 = sphi 0, %s106
    %s109 = sphi 0, %s108
    %s123 = sphi 0, %s109
    %s127 = sphi 0, %s127
    %s129 = sphi 0, %s127
    %s130 = sphi 0, %s129
    %s144 = sphi 0, %s130
    %s148 = sphi 0, %s148
    %s150 = sphi 0, %s148
    %s151 = sphi 0, %s150
    %s165 = sphi 0, %s151
    %s169 = sphi 0, %s169
    %s171 = sphi 0, %s169
    %s172 = sphi 0, %s171
    %s186 = sphi 0, %s172
    %s190 = sphi 0, %s190
    %s192 = sphi 0, %s190
    %s193 = sphi 0, %s192
    %s207 = sphi 0, %s193
    %s211 = sphi 0, %s211
    %s213 = sphi 0, %s211
    %s214 = sphi 0, %s213
    %s228 = sphi 0, %s214
    %s232 = sphi 0, %s232
    %s234 = sphi 0, %s232
    %s235 = sphi 0, %s234
    %s249 = sphi 0, %s235
    %s253 = sphi 0, %s253
    %s255 = sphi 0, %s253
    %s256 = sphi 0, %s255
    %s270 = sphi 0, %s256
    %s274 = sphi 0, %s274
    %s276 = sphi 0, %s274
    %s277 = sphi 0, %s276
    %s291 = sphi 0, %s277
    %s295 = sphi 0, %s295
    %s297 = sphi 0, %s295
    %s298 = sphi 0, %s297
    %s312 = sphi 0, %s298
    %s316 = sphi 0, %s316
    %s318 = sphi 0, %s316
    %s319 = sphi 0, %s318
    %s333 = sphi 0, %s319
    %s337 = sphi 0, %s337
    %s339 = sphi 0, %s337
    %s340 = sphi 0, %s339
    %s354 = sphi 0, %s340
    %s358 = sphi 0, %s358
    %s360 = sphi 0, %s358
    %s361 = sphi 0, %s360
    %s375 = sphi 0, %s361
    %s379 = sphi 0, %s379
    %s381 = sphi 0, %s379
    %s382 = sphi 0, %s381
    %s396 = sphi 0, %s382
    %s400 = sphi 0, %s400
    %s402 = sphi 0, %s400
    %s403 = sphi 0, %s402
    %s417 = sphi 0, %s403
    %s421 = sphi 0, %s421
    %s423 = sphi 0, %s421
    %s424 = sphi 0, %s423
    %s438 = sphi 0, %s424
    %s442 = sphi 0, %s442
    %s444 = sphi 0, %s442
    %s445 = sphi 0, %s444
    %s459 = sphi 0, %s445
    %s463 = sphi 0, %s463
    %s465 = sphi 0, %s463
    %s466 = sphi 0, %s465
    %s480 = sphi 0, %s466
    %s484 = sphi 0, %s484
    %s486 = sphi 0, %s484
    %s487 = sphi 0, %s486
    %s501 = sphi 0, %s487
    %s507 = sphi 0, %s509
    %s510 = sphi 0, %s507
    %s511 = sphi 0, %s510
    %s527 = sphi 0, %s511
  $region4: #{srrn_pallas.1} parent=0 // loop_header_branch
    %33 = sbr.rel (%p31) target = $region8
  $region5: #{srrn_pallas.1} parent=0 // loop_body
    %s35 = ssub.s32 %s30, 1
    %s36 = ssub.s32 %s30, 2
    %s37 = sadd.s32 %s30, 1
    %s38 = ssub.s32 %s30, %s37
    %p39 = scmp.eq.s32.totalorder %s38, 0
    %s41 = sadd.s32 %s40, 1
    %s42 = scalar_select %p39, %s40, %s41
    %p45 = pneg %p39
    %p46 = scmp.eq.s32.totalorder %s30, 1
    %p47 = por %p45, %p46
    %p48 = scmp.ne.s32.totalorder %s40, %s43
    %p49 = scmp.eq.s32.totalorder %s30, 0
    %p50 = por %p48, %p49
    %p51 = scmp.ne.s32.totalorder %s40, %s43
    %p52 = scmp.eq.s32.totalorder %s35, 1
    %p53 = por %p51, %p52
    %p54 = scmp.ne.s32.totalorder %s43, %s44
    %p55 = scmp.eq.s32.totalorder %s35, 0
    %p56 = por %p54, %p55
    %p57 = scmp.ne.s32.totalorder %s43, %s44
    %p58 = scmp.eq.s32.totalorder %s36, 1
    %p59 = por %p57, %p58
    %p61 = scmp.ne.s32.totalorder %s44, %s60
    %p62 = scmp.eq.s32.totalorder %s36, 0
    %p63 = por %p61, %p62
    %s65 = sadd.s32 %s64, 1
    %p68 = scmp.eq.s32.totalorder %s30, 1
    %p69 = scmp.ne.s32.totalorder %s64, %s66
    %p70 = scmp.eq.s32.totalorder %s30, 0
    %p71 = por %p69, %p70
    %p72 = scmp.ne.s32.totalorder %s64, %s66
    %p73 = scmp.eq.s32.totalorder %s35, 1
    %p74 = por %p72, %p73
    %p75 = scmp.ne.s32.totalorder %s66, %s67
    %p76 = scmp.eq.s32.totalorder %s35, 0
    %p77 = por %p75, %p76
    %p78 = scmp.ne.s32.totalorder %s66, %s67
    %p79 = scmp.eq.s32.totalorder %s36, 1
    %p80 = por %p78, %p79
    %p82 = scmp.ne.s32.totalorder %s67, %s81
    %p83 = scmp.eq.s32.totalorder %s36, 0
    %p84 = por %p82, %p83
    %s86 = sadd.s32 %s85, 1
    %p89 = scmp.eq.s32.totalorder %s30, 1
    %p90 = scmp.ne.s32.totalorder %s85, %s87
    %p91 = scmp.eq.s32.totalorder %s30, 0
    %p92 = por %p90, %p91
    %p93 = scmp.ne.s32.totalorder %s85, %s87
    %p94 = scmp.eq.s32.totalorder %s35, 1
    %p95 = por %p93, %p94
    %p96 = scmp.ne.s32.totalorder %s87, %s88
    %p97 = scmp.eq.s32.totalorder %s35, 0
    %p98 = por %p96, %p97
    %p99 = scmp.ne.s32.totalorder %s87, %s88
    %p100 = scmp.eq.s32.totalorder %s36, 1
    %p101 = por %p99, %p100
    %p103 = scmp.ne.s32.totalorder %s88, %s102
    %p104 = scmp.eq.s32.totalorder %s36, 0
    %p105 = por %p103, %p104
    %s107 = sadd.s32 %s106, 1
    %p110 = scmp.eq.s32.totalorder %s30, 1
    %p111 = scmp.ne.s32.totalorder %s106, %s108
    %p112 = scmp.eq.s32.totalorder %s30, 0
    %p113 = por %p111, %p112
    %p114 = scmp.ne.s32.totalorder %s106, %s108
    %p115 = scmp.eq.s32.totalorder %s35, 1
    %p116 = por %p114, %p115
    %p117 = scmp.ne.s32.totalorder %s108, %s109
    %p118 = scmp.eq.s32.totalorder %s35, 0
    %p119 = por %p117, %p118
    %p120 = scmp.ne.s32.totalorder %s108, %s109
    %p121 = scmp.eq.s32.totalorder %s36, 1
    %p122 = por %p120, %p121
    %p124 = scmp.ne.s32.totalorder %s109, %s123
    %p125 = scmp.eq.s32.totalorder %s36, 0
    %p126 = por %p124, %p125
    %s128 = sadd.s32 %s127, 1
    %p131 = scmp.eq.s32.totalorder %s30, 1
    %p132 = scmp.ne.s32.totalorder %s127, %s129
    %p133 = scmp.eq.s32.totalorder %s30, 0
    %p134 = por %p132, %p133
    %p135 = scmp.ne.s32.totalorder %s127, %s129
    %p136 = scmp.eq.s32.totalorder %s35, 1
    %p137 = por %p135, %p136
    %p138 = scmp.ne.s32.totalorder %s129, %s130
    %p139 = scmp.eq.s32.totalorder %s35, 0
    %p140 = por %p138, %p139
    %p141 = scmp.ne.s32.totalorder %s129, %s130
    %p142 = scmp.eq.s32.totalorder %s36, 1
    %p143 = por %p141, %p142
    %p145 = scmp.ne.s32.totalorder %s130, %s144
    %p146 = scmp.eq.s32.totalorder %s36, 0
    %p147 = por %p145, %p146
    %s149 = sadd.s32 %s148, 1
    %p152 = scmp.eq.s32.totalorder %s30, 1
    %p153 = scmp.ne.s32.totalorder %s148, %s150
    %p154 = scmp.eq.s32.totalorder %s30, 0
    %p155 = por %p153, %p154
    %p156 = scmp.ne.s32.totalorder %s148, %s150
    %p157 = scmp.eq.s32.totalorder %s35, 1
    %p158 = por %p156, %p157
    %p159 = scmp.ne.s32.totalorder %s150, %s151
    %p160 = scmp.eq.s32.totalorder %s35, 0
    %p161 = por %p159, %p160
    %p162 = scmp.ne.s32.totalorder %s150, %s151
    %p163 = scmp.eq.s32.totalorder %s36, 1
    %p164 = por %p162, %p163
    %p166 = scmp.ne.s32.totalorder %s151, %s165
    %p167 = scmp.eq.s32.totalorder %s36, 0
    %p168 = por %p166, %p167
    %s170 = sadd.s32 %s169, 1
    %p173 = scmp.eq.s32.totalorder %s30, 1
    %p174 = scmp.ne.s32.totalorder %s169, %s171
    %p175 = scmp.eq.s32.totalorder %s30, 0
    %p176 = por %p174, %p175
    %p177 = scmp.ne.s32.totalorder %s169, %s171
    %p178 = scmp.eq.s32.totalorder %s35, 1
    %p179 = por %p177, %p178
    %p180 = scmp.ne.s32.totalorder %s171, %s172
    %p181 = scmp.eq.s32.totalorder %s35, 0
    %p182 = por %p180, %p181
    %p183 = scmp.ne.s32.totalorder %s171, %s172
    %p184 = scmp.eq.s32.totalorder %s36, 1
    %p185 = por %p183, %p184
    %p187 = scmp.ne.s32.totalorder %s172, %s186
    %p188 = scmp.eq.s32.totalorder %s36, 0
    %p189 = por %p187, %p188
    %s191 = sadd.s32 %s190, 1
    %p194 = scmp.eq.s32.totalorder %s30, 1
    %p195 = scmp.ne.s32.totalorder %s190, %s192
    %p196 = scmp.eq.s32.totalorder %s30, 0
    %p197 = por %p195, %p196
    %p198 = scmp.ne.s32.totalorder %s190, %s192
    %p199 = scmp.eq.s32.totalorder %s35, 1
    %p200 = por %p198, %p199
    %p201 = scmp.ne.s32.totalorder %s192, %s193
    %p202 = scmp.eq.s32.totalorder %s35, 0
    %p203 = por %p201, %p202
    %p204 = scmp.ne.s32.totalorder %s192, %s193
    %p205 = scmp.eq.s32.totalorder %s36, 1
    %p206 = por %p204, %p205
    %p208 = scmp.ne.s32.totalorder %s193, %s207
    %p209 = scmp.eq.s32.totalorder %s36, 0
    %p210 = por %p208, %p209
    %s212 = sadd.s32 %s211, 1
    %p215 = scmp.eq.s32.totalorder %s30, 1
    %p216 = scmp.ne.s32.totalorder %s211, %s213
    %p217 = scmp.eq.s32.totalorder %s30, 0
    %p218 = por %p216, %p217
    %p219 = scmp.ne.s32.totalorder %s211, %s213
    %p220 = scmp.eq.s32.totalorder %s35, 1
    %p221 = por %p219, %p220
    %p222 = scmp.ne.s32.totalorder %s213, %s214
    %p223 = scmp.eq.s32.totalorder %s35, 0
    %p224 = por %p222, %p223
    %p225 = scmp.ne.s32.totalorder %s213, %s214
    %p226 = scmp.eq.s32.totalorder %s36, 1
    %p227 = por %p225, %p226
    %p229 = scmp.ne.s32.totalorder %s214, %s228
    %p230 = scmp.eq.s32.totalorder %s36, 0
    %p231 = por %p229, %p230
    %s233 = sadd.s32 %s232, 1
    %p236 = scmp.eq.s32.totalorder %s30, 1
    %p237 = scmp.ne.s32.totalorder %s232, %s234
    %p238 = scmp.eq.s32.totalorder %s30, 0
    %p239 = por %p237, %p238
    %p240 = scmp.ne.s32.totalorder %s232, %s234
    %p241 = scmp.eq.s32.totalorder %s35, 1
    %p242 = por %p240, %p241
    %p243 = scmp.ne.s32.totalorder %s234, %s235
    %p244 = scmp.eq.s32.totalorder %s35, 0
    %p245 = por %p243, %p244
    %p246 = scmp.ne.s32.totalorder %s234, %s235
    %p247 = scmp.eq.s32.totalorder %s36, 1
    %p248 = por %p246, %p247
    %p250 = scmp.ne.s32.totalorder %s235, %s249
    %p251 = scmp.eq.s32.totalorder %s36, 0
    %p252 = por %p250, %p251
    %s254 = sadd.s32 %s253, 1
    %p257 = scmp.eq.s32.totalorder %s30, 1
    %p258 = scmp.ne.s32.totalorder %s253, %s255
    %p259 = scmp.eq.s32.totalorder %s30, 0
    %p260 = por %p258, %p259
    %p261 = scmp.ne.s32.totalorder %s253, %s255
    %p262 = scmp.eq.s32.totalorder %s35, 1
    %p263 = por %p261, %p262
    %p264 = scmp.ne.s32.totalorder %s255, %s256
    %p265 = scmp.eq.s32.totalorder %s35, 0
    %p266 = por %p264, %p265
    %p267 = scmp.ne.s32.totalorder %s255, %s256
    %p268 = scmp.eq.s32.totalorder %s36, 1
    %p269 = por %p267, %p268
    %p271 = scmp.ne.s32.totalorder %s256, %s270
    %p272 = scmp.eq.s32.totalorder %s36, 0
    %p273 = por %p271, %p272
    %s275 = sadd.s32 %s274, 1
    %p278 = scmp.eq.s32.totalorder %s30, 1
    %p279 = scmp.ne.s32.totalorder %s274, %s276
    %p280 = scmp.eq.s32.totalorder %s30, 0
    %p281 = por %p279, %p280
    %p282 = scmp.ne.s32.totalorder %s274, %s276
    %p283 = scmp.eq.s32.totalorder %s35, 1
    %p284 = por %p282, %p283
    %p285 = scmp.ne.s32.totalorder %s276, %s277
    %p286 = scmp.eq.s32.totalorder %s35, 0
    %p287 = por %p285, %p286
    %p288 = scmp.ne.s32.totalorder %s276, %s277
    %p289 = scmp.eq.s32.totalorder %s36, 1
    %p290 = por %p288, %p289
    %p292 = scmp.ne.s32.totalorder %s277, %s291
    %p293 = scmp.eq.s32.totalorder %s36, 0
    %p294 = por %p292, %p293
    %s296 = sadd.s32 %s295, 1
    %p299 = scmp.eq.s32.totalorder %s30, 1
    %p300 = scmp.ne.s32.totalorder %s295, %s297
    %p301 = scmp.eq.s32.totalorder %s30, 0
    %p302 = por %p300, %p301
    %p303 = scmp.ne.s32.totalorder %s295, %s297
    %p304 = scmp.eq.s32.totalorder %s35, 1
    %p305 = por %p303, %p304
    %p306 = scmp.ne.s32.totalorder %s297, %s298
    %p307 = scmp.eq.s32.totalorder %s35, 0
    %p308 = por %p306, %p307
    %p309 = scmp.ne.s32.totalorder %s297, %s298
    %p310 = scmp.eq.s32.totalorder %s36, 1
    %p311 = por %p309, %p310
    %p313 = scmp.ne.s32.totalorder %s298, %s312
    %p314 = scmp.eq.s32.totalorder %s36, 0
    %p315 = por %p313, %p314
    %s317 = sadd.s32 %s316, 1
    %p320 = scmp.eq.s32.totalorder %s30, 1
    %p321 = scmp.ne.s32.totalorder %s316, %s318
    %p322 = scmp.eq.s32.totalorder %s30, 0
    %p323 = por %p321, %p322
    %p324 = scmp.ne.s32.totalorder %s316, %s318
    %p325 = scmp.eq.s32.totalorder %s35, 1
    %p326 = por %p324, %p325
    %p327 = scmp.ne.s32.totalorder %s318, %s319
    %p328 = scmp.eq.s32.totalorder %s35, 0
    %p329 = por %p327, %p328
    %p330 = scmp.ne.s32.totalorder %s318, %s319
    %p331 = scmp.eq.s32.totalorder %s36, 1
    %p332 = por %p330, %p331
    %p334 = scmp.ne.s32.totalorder %s319, %s333
    %p335 = scmp.eq.s32.totalorder %s36, 0
    %p336 = por %p334, %p335
    %s338 = sadd.s32 %s337, 1
    %p341 = scmp.eq.s32.totalorder %s30, 1
    %p342 = scmp.ne.s32.totalorder %s337, %s339
    %p343 = scmp.eq.s32.totalorder %s30, 0
    %p344 = por %p342, %p343
    %p345 = scmp.ne.s32.totalorder %s337, %s339
    %p346 = scmp.eq.s32.totalorder %s35, 1
    %p347 = por %p345, %p346
    %p348 = scmp.ne.s32.totalorder %s339, %s340
    %p349 = scmp.eq.s32.totalorder %s35, 0
    %p350 = por %p348, %p349
    %p351 = scmp.ne.s32.totalorder %s339, %s340
    %p352 = scmp.eq.s32.totalorder %s36, 1
    %p353 = por %p351, %p352
    %p355 = scmp.ne.s32.totalorder %s340, %s354
    %p356 = scmp.eq.s32.totalorder %s36, 0
    %p357 = por %p355, %p356
    %s359 = sadd.s32 %s358, 1
    %p362 = scmp.eq.s32.totalorder %s30, 1
    %p363 = scmp.ne.s32.totalorder %s358, %s360
    %p364 = scmp.eq.s32.totalorder %s30, 0
    %p365 = por %p363, %p364
    %p366 = scmp.ne.s32.totalorder %s358, %s360
    %p367 = scmp.eq.s32.totalorder %s35, 1
    %p368 = por %p366, %p367
    %p369 = scmp.ne.s32.totalorder %s360, %s361
    %p370 = scmp.eq.s32.totalorder %s35, 0
    %p371 = por %p369, %p370
    %p372 = scmp.ne.s32.totalorder %s360, %s361
    %p373 = scmp.eq.s32.totalorder %s36, 1
    %p374 = por %p372, %p373
    %p376 = scmp.ne.s32.totalorder %s361, %s375
    %p377 = scmp.eq.s32.totalorder %s36, 0
    %p378 = por %p376, %p377
    %s380 = sadd.s32 %s379, 1
    %p383 = scmp.eq.s32.totalorder %s30, 1
    %p384 = scmp.ne.s32.totalorder %s379, %s381
    %p385 = scmp.eq.s32.totalorder %s30, 0
    %p386 = por %p384, %p385
    %p387 = scmp.ne.s32.totalorder %s379, %s381
    %p388 = scmp.eq.s32.totalorder %s35, 1
    %p389 = por %p387, %p388
    %p390 = scmp.ne.s32.totalorder %s381, %s382
    %p391 = scmp.eq.s32.totalorder %s35, 0
    %p392 = por %p390, %p391
    %p393 = scmp.ne.s32.totalorder %s381, %s382
    %p394 = scmp.eq.s32.totalorder %s36, 1
    %p395 = por %p393, %p394
    %p397 = scmp.ne.s32.totalorder %s382, %s396
    %p398 = scmp.eq.s32.totalorder %s36, 0
    %p399 = por %p397, %p398
    %s401 = sadd.s32 %s400, 1
    %p404 = scmp.eq.s32.totalorder %s30, 1
    %p405 = scmp.ne.s32.totalorder %s400, %s402
    %p406 = scmp.eq.s32.totalorder %s30, 0
    %p407 = por %p405, %p406
    %p408 = scmp.ne.s32.totalorder %s400, %s402
    %p409 = scmp.eq.s32.totalorder %s35, 1
    %p410 = por %p408, %p409
    %p411 = scmp.ne.s32.totalorder %s402, %s403
    %p412 = scmp.eq.s32.totalorder %s35, 0
    %p413 = por %p411, %p412
    %p414 = scmp.ne.s32.totalorder %s402, %s403
    %p415 = scmp.eq.s32.totalorder %s36, 1
    %p416 = por %p414, %p415
    %p418 = scmp.ne.s32.totalorder %s403, %s417
    %p419 = scmp.eq.s32.totalorder %s36, 0
    %p420 = por %p418, %p419
    %s422 = sadd.s32 %s421, 1
    %p425 = scmp.eq.s32.totalorder %s30, 1
    %p426 = scmp.ne.s32.totalorder %s421, %s423
    %p427 = scmp.eq.s32.totalorder %s30, 0
    %p428 = por %p426, %p427
    %p429 = scmp.ne.s32.totalorder %s421, %s423
    %p430 = scmp.eq.s32.totalorder %s35, 1
    %p431 = por %p429, %p430
    %p432 = scmp.ne.s32.totalorder %s423, %s424
    %p433 = scmp.eq.s32.totalorder %s35, 0
    %p434 = por %p432, %p433
    %p435 = scmp.ne.s32.totalorder %s423, %s424
    %p436 = scmp.eq.s32.totalorder %s36, 1
    %p437 = por %p435, %p436
    %p439 = scmp.ne.s32.totalorder %s424, %s438
    %p440 = scmp.eq.s32.totalorder %s36, 0
    %p441 = por %p439, %p440
    %s443 = sadd.s32 %s442, 1
    %p446 = scmp.eq.s32.totalorder %s30, 1
    %p447 = scmp.ne.s32.totalorder %s442, %s444
    %p448 = scmp.eq.s32.totalorder %s30, 0
    %p449 = por %p447, %p448
    %p450 = scmp.ne.s32.totalorder %s442, %s444
    %p451 = scmp.eq.s32.totalorder %s35, 1
    %p452 = por %p450, %p451
    %p453 = scmp.ne.s32.totalorder %s444, %s445
    %p454 = scmp.eq.s32.totalorder %s35, 0
    %p455 = por %p453, %p454
    %p456 = scmp.ne.s32.totalorder %s444, %s445
    %p457 = scmp.eq.s32.totalorder %s36, 1
    %p458 = por %p456, %p457
    %p460 = scmp.ne.s32.totalorder %s445, %s459
    %p461 = scmp.eq.s32.totalorder %s36, 0
    %p462 = por %p460, %p461
    %s464 = sadd.s32 %s463, 1
    %p467 = scmp.eq.s32.totalorder %s30, 1
    %p468 = scmp.ne.s32.totalorder %s463, %s465
    %p469 = scmp.eq.s32.totalorder %s30, 0
    %p470 = por %p468, %p469
    %p471 = scmp.ne.s32.totalorder %s463, %s465
    %p472 = scmp.eq.s32.totalorder %s35, 1
    %p473 = por %p471, %p472
    %p474 = scmp.ne.s32.totalorder %s465, %s466
    %p475 = scmp.eq.s32.totalorder %s35, 0
    %p476 = por %p474, %p475
    %p477 = scmp.ne.s32.totalorder %s465, %s466
    %p478 = scmp.eq.s32.totalorder %s36, 1
    %p479 = por %p477, %p478
    %p481 = scmp.ne.s32.totalorder %s466, %s480
    %p482 = scmp.eq.s32.totalorder %s36, 0
    %p483 = por %p481, %p482
    %s485 = sadd.s32 %s484, 1
    %p488 = scmp.eq.s32.totalorder %s30, 1
    %p489 = scmp.ne.s32.totalorder %s484, %s486
    %p490 = scmp.eq.s32.totalorder %s30, 0
    %p491 = por %p489, %p490
    %p492 = scmp.ne.s32.totalorder %s484, %s486
    %p493 = scmp.eq.s32.totalorder %s35, 1
    %p494 = por %p492, %p493
    %p495 = scmp.ne.s32.totalorder %s486, %s487
    %p496 = scmp.eq.s32.totalorder %s35, 0
    %p497 = por %p495, %p496
    %p498 = scmp.ne.s32.totalorder %s486, %s487
    %p499 = scmp.eq.s32.totalorder %s36, 1
    %p500 = por %p498, %p499
    %p502 = scmp.ne.s32.totalorder %s487, %s501
    %p503 = scmp.eq.s32.totalorder %s36, 0
    %p504 = por %p502, %p503
    %s505 = ssub.s32 %s30, %s37
    %p506 = scmp.eq.s32.totalorder %s505, 0
    %s508 = sadd.s32 %s507, 1
    %s509 = scalar_select %p506, %s507, %s508
    %p512 = pneg %p506
    %p513 = scmp.eq.s32.totalorder %s30, 1
    %p514 = por %p512, %p513
    %p515 = scmp.ne.s32.totalorder %s507, %s510
    %p516 = scmp.eq.s32.totalorder %s30, 0
    %p517 = por %p515, %p516
    %p518 = scmp.ne.s32.totalorder %s507, %s510
    %p519 = scmp.eq.s32.totalorder %s35, 1
    %p520 = por %p518, %p519
    %p521 = scmp.ne.s32.totalorder %s510, %s511
    %p522 = scmp.eq.s32.totalorder %s35, 0
    %p523 = por %p521, %p522
    %p524 = scmp.ne.s32.totalorder %s510, %s511
    %p525 = scmp.eq.s32.totalorder %s36, 1
    %p526 = por %p524, %p525
    %p528 = scmp.ne.s32.totalorder %s511, %s527
    %p529 = scmp.eq.s32.totalorder %s36, 0
    %p530 = por %p528, %p529
    %p531 = scmp.le.s32.totalorder 1, %s30
    %p532 = scmp.lt.s32.totalorder %s30, 3
    %p533 = pnand %p531, %p532
    %p534 = pneg %p533
    // Predicated region
    $region9: #{srrn_pallas.1} parent=5 // pred_check
      _
    $region10: #{srrn_pallas.1} parent=5 // pred_check_branch
      %536 = sbr.rel (%p533) target = $region12
    $region11: #{srrn_pallas.1} parent=5 // pred_region
      %s537 = ssub.s32 %s30, 1
      // Predicated region
      $region13: #{srrn_pallas.1} parent=11 // pred_check
        %p538 = pneg %p77
      $region14: #{srrn_pallas.1} parent=11 // pred_check_branch
        %540 = sbr.rel (%p538) target = $region16
      $region15: #{srrn_pallas.1} parent=11 // pred_region
        _
      $region16: #{srrn_pallas.1} parent=11 // pred_fallthru
        _
      // Predicated region
      $region17: #{srrn_pallas.1} parent=11 // pred_check
        %p541 = pneg %p98
      $region18: #{srrn_pallas.1} parent=11 // pred_check_branch
        %543 = sbr.rel (%p541) target = $region20
      $region19: #{srrn_pallas.1} parent=11 // pred_region
        _
      $region20: #{srrn_pallas.1} parent=11 // pred_fallthru
        _
      // Predicated region
      $region21: #{srrn_pallas.1} parent=11 // pred_check
        %p544 = pneg %p119
      $region22: #{srrn_pallas.1} parent=11 // pred_check_branch
        %546 = sbr.rel (%p544) target = $region24
      $region23: #{srrn_pallas.1} parent=11 // pred_region
        _
      $region24: #{srrn_pallas.1} parent=11 // pred_fallthru
        _
      // Predicated region
      $region25: #{srrn_pallas.1} parent=11 // pred_check
        %p547 = pneg %p140
      $region26: #{srrn_pallas.1} parent=11 // pred_check_branch
        %549 = sbr.rel (%p547) target = $region28
      $region27: #{srrn_pallas.1} parent=11 // pred_region
        _
      $region28: #{srrn_pallas.1} parent=11 // pred_fallthru
        _
      // Predicated region
      $region29: #{srrn_pallas.1} parent=11 // pred_check
        %p550 = pneg %p161
      $region30: #{srrn_pallas.1} parent=11 // pred_check_branch
        %552 = sbr.rel (%p550) target = $region32
      $region31: #{srrn_pallas.1} parent=11 // pred_region
        _
      $region32: #{srrn_pallas.1} parent=11 // pred_fallthru
        _
      // Predicated region
      $region33: #{srrn_pallas.1} parent=11 // pred_check
        %p553 = pneg %p182
      $region34: #{srrn_pallas.1} parent=11 // pred_check_branch
        %555 = sbr.rel (%p553) target = $region36
      $region35: #{srrn_pallas.1} parent=11 // pred_region
        _
      $region36: #{srrn_pallas.1} parent=11 // pred_fallthru
        _
      // Predicated region
      $region37: #{srrn_pallas.1} parent=11 // pred_check
        %p556 = pneg %p203
      $region38: #{srrn_pallas.1} parent=11 // pred_check_branch
        %558 = sbr.rel (%p556) target = $region40
      $region39: #{srrn_pallas.1} parent=11 // pred_region
        _
      $region40: #{srrn_pallas.1} parent=11 // pred_fallthru
        _
      // Predicated region
      $region41: #{srrn_pallas.1} parent=11 // pred_check
        %p559 = pneg %p224
      $region42: #{srrn_pallas.1} parent=11 // pred_check_branch
        %561 = sbr.rel (%p559) target = $region44
      $region43: #{srrn_pallas.1} parent=11 // pred_region
        _
      $region44: #{srrn_pallas.1} parent=11 // pred_fallthru
        _
      // Predicated region
      $region45: #{srrn_pallas.1} parent=11 // pred_check
        %p562 = pneg %p245
      $region46: #{srrn_pallas.1} parent=11 // pred_check_branch
        %564 = sbr.rel (%p562) target = $region48
      $region47: #{srrn_pallas.1} parent=11 // pred_region
        _
      $region48: #{srrn_pallas.1} parent=11 // pred_fallthru
        _
      // Predicated region
      $region49: #{srrn_pallas.1} parent=11 // pred_check
        %p565 = pneg %p266
      $region50: #{srrn_pallas.1} parent=11 // pred_check_branch
        %567 = sbr.rel (%p565) target = $region52
      $region51: #{srrn_pallas.1} parent=11 // pred_region
        _
      $region52: #{srrn_pallas.1} parent=11 // pred_fallthru
        _
      // Predicated region
      $region53: #{srrn_pallas.1} parent=11 // pred_check
        %p568 = pneg %p287
      $region54: #{srrn_pallas.1} parent=11 // pred_check_branch
        %570 = sbr.rel (%p568) target = $region56
      $region55: #{srrn_pallas.1} parent=11 // pred_region
        _
      $region56: #{srrn_pallas.1} parent=11 // pred_fallthru
        _
      // Predicated region
      $region57: #{srrn_pallas.1} parent=11 // pred_check
        %p571 = pneg %p308
      $region58: #{srrn_pallas.1} parent=11 // pred_check_branch
        %573 = sbr.rel (%p571) target = $region60
      $region59: #{srrn_pallas.1} parent=11 // pred_region
        _
      $region60: #{srrn_pallas.1} parent=11 // pred_fallthru
        _
      // Predicated region
      $region61: #{srrn_pallas.1} parent=11 // pred_check
        %p574 = pneg %p329
      $region62: #{srrn_pallas.1} parent=11 // pred_check_branch
        %576 = sbr.rel (%p574) target = $region64
      $region63: #{srrn_pallas.1} parent=11 // pred_region
        _
      $region64: #{srrn_pallas.1} parent=11 // pred_fallthru
        _
      // Predicated region
      $region65: #{srrn_pallas.1} parent=11 // pred_check
        %p577 = pneg %p350
      $region66: #{srrn_pallas.1} parent=11 // pred_check_branch
        %579 = sbr.rel (%p577) target = $region68
      $region67: #{srrn_pallas.1} parent=11 // pred_region
        _
      $region68: #{srrn_pallas.1} parent=11 // pred_fallthru
        _
      // Predicated region
      $region69: #{srrn_pallas.1} parent=11 // pred_check
        %p580 = pneg %p371
      $region70: #{srrn_pallas.1} parent=11 // pred_check_branch
        %582 = sbr.rel (%p580) target = $region72
      $region71: #{srrn_pallas.1} parent=11 // pred_region
        _
      $region72: #{srrn_pallas.1} parent=11 // pred_fallthru
        _
      // Predicated region
      $region73: #{srrn_pallas.1} parent=11 // pred_check
        %p583 = pneg %p392
      $region74: #{srrn_pallas.1} parent=11 // pred_check_branch
        %585 = sbr.rel (%p583) target = $region76
      $region75: #{srrn_pallas.1} parent=11 // pred_region
        _
      $region76: #{srrn_pallas.1} parent=11 // pred_fallthru
        _
      // Predicated region
      $region77: #{srrn_pallas.1} parent=11 // pred_check
        %p586 = pneg %p413
      $region78: #{srrn_pallas.1} parent=11 // pred_check_branch
        %588 = sbr.rel (%p586) target = $region80
      $region79: #{srrn_pallas.1} parent=11 // pred_region
        _
      $region80: #{srrn_pallas.1} parent=11 // pred_fallthru
        _
      // Predicated region
      $region81: #{srrn_pallas.1} parent=11 // pred_check
        %p589 = pneg %p434
      $region82: #{srrn_pallas.1} parent=11 // pred_check_branch
        %591 = sbr.rel (%p589) target = $region84
      $region83: #{srrn_pallas.1} parent=11 // pred_region
        _
      $region84: #{srrn_pallas.1} parent=11 // pred_fallthru
        _
      // Predicated region
      $region85: #{srrn_pallas.1} parent=11 // pred_check
        %p592 = pneg %p455
      $region86: #{srrn_pallas.1} parent=11 // pred_check_branch
        %594 = sbr.rel (%p592) target = $region88
      $region87: #{srrn_pallas.1} parent=11 // pred_region
        _
      $region88: #{srrn_pallas.1} parent=11 // pred_fallthru
        _
      // Predicated region
      $region89: #{srrn_pallas.1} parent=11 // pred_check
        %p595 = pneg %p476
      $region90: #{srrn_pallas.1} parent=11 // pred_check_branch
        %597 = sbr.rel (%p595) target = $region92
      $region91: #{srrn_pallas.1} parent=11 // pred_region
        _
      $region92: #{srrn_pallas.1} parent=11 // pred_fallthru
        _
      // Predicated region
      $region93: #{srrn_pallas.1} parent=11 // pred_check
        %p598 = pneg %p497
      $region94: #{srrn_pallas.1} parent=11 // pred_check_branch
        %600 = sbr.rel (%p598) target = $region96
      $region95: #{srrn_pallas.1} parent=11 // pred_region
        _
      $region96: #{srrn_pallas.1} parent=11 // pred_fallthru
        _
    $region12: #{srrn_pallas.1} parent=5 // pred_fallthru
      _
    %p601 = scmp.lt.s32.totalorder %s30, 2
    // Predicated region
    $region97: #{srrn_pallas.1} parent=5 // pred_check
      %p602 = pneg %p601
    $region98: #{srrn_pallas.1} parent=5 // pred_check_branch
      %604 = sbr.rel (%p602) target = $region100
    $region99: #{srrn_pallas.1} parent=5 // pred_region
      // Predicated region
      $region101: #{srrn_pallas.1} parent=99 // pred_check
        %p605 = pneg %p50
      $region102: #{srrn_pallas.1} parent=99 // pred_check_branch
        %607 = sbr.rel (%p605) target = $region104
      $region103: #{srrn_pallas.1} parent=99 // pred_region
        %p608 = scmp.lt.s32.totalorder %s30, 1
        %s609 = scalar_select %p608, %s30, 1
        %s610 = smul.addr %s609, 8
        %s611 = scalar_lea.vmem %s0, %s610
      $region104: #{srrn_pallas.1} parent=99 // pred_fallthru
        _
    $region100: #{srrn_pallas.1} parent=5 // pred_fallthru
      _
    %p612 = scmp.le.s32.totalorder 1, %s30
    %p613 = scmp.lt.s32.totalorder %s30, 3
    %p614 = pnand %p612, %p613
    %p615 = pneg %p614
    // Predicated region
    $region105: #{srrn_pallas.1} parent=5 // pred_check
      _
    $region106: #{srrn_pallas.1} parent=5 // pred_check_branch
      %617 = sbr.rel (%p614) target = $region108
    $region107: #{srrn_pallas.1} parent=5 // pred_region
      %s618 = ssub.s32 %s30, 1
      %p619 = scmp.lt.s32.totalorder %s35, 1
      %s620 = scalar_select %p619, %s35, 1
      %s621 = smul.addr %s620, 8
      %s622 = scalar_lea.vmem %s0, %s621
      %p623 = pneg %p56
      %p624 = pneg %p53
      %p625 = pneg %p77
      %p626 = pneg %p74
      %p627 = pneg %p98
      %p628 = pneg %p95
      %p629 = pneg %p119
      %p630 = pneg %p116
      %p631 = pneg %p140
      %p632 = pneg %p137
      %p633 = pneg %p161
      %p634 = pneg %p158
      %p635 = pneg %p182
      %p636 = pneg %p179
      %p637 = pneg %p203
      %p638 = pneg %p200
      %p639 = pneg %p224
      %p640 = pneg %p221
      %p641 = pneg %p245
      %p642 = pneg %p242
      %p643 = pneg %p266
      %p644 = pneg %p263
      %p645 = pneg %p287
      %p646 = pneg %p284
      %p647 = pneg %p308
      %p648 = pneg %p305
      %p649 = pneg %p329
      %p650 = pneg %p326
      %p651 = pneg %p350
      %p652 = pneg %p347
      %p653 = pneg %p371
      %p654 = pneg %p368
      %p655 = pneg %p392
      %p656 = pneg %p389
      %p657 = pneg %p413
      %p658 = pneg %p410
      %p659 = pneg %p434
      %p660 = pneg %p431
      %p661 = pneg %p455
      %p662 = pneg %p452
      %p663 = pneg %p476
      %p664 = pneg %p473
      %p665 = pneg %p497
      %p666 = pneg %p494
      %p667 = pneg %p523
      %p668 = pneg %p520
      %p669 = scmp.lt.s32.totalorder %s35, 1
      %s670 = scalar_select %p669, %s35, 1
      %s671 = smul.addr %s670, 8
      %s672 = scalar_lea.vmem %s22, %s671
      %p673 = scmp.lt.s32.totalorder %s35, 1
      %s674 = scalar_select %p673, %s35, 1
      %s675 = smul.addr %s674, 8
      %s676 = scalar_lea.vmem %s0, %s675
      %p677 = scmp.lt.s32.totalorder %s35, 1
      %s678 = scalar_select %p677, %s35, 1
      %s679 = smul.addr %s678, 8
      %s680 = scalar_lea.vmem %s22, %s679
      %v682 = vld [vmem:[%s676] sm:$0xff]
      %v683 = vpack.c.bf16 %v682, %v682
      %v684 = vmax.bf16 %v683, 0
      %v685 = vld [vmem:[%s1] sm:$0xff]
      %v686 = vld [vmem:[%s1 + $0x8] sm:$0xff]
      %v687 = vld [vmem:[%s1 + $0x10] sm:$0xff]
      %v688 = vld [vmem:[%s1 + $0x18] sm:$0xff]
      %v689 = vld [vmem:[%s1 + $0x20] sm:$0x11]
      %v695 = vunpack.c.l.b16 %v685
      %v696 = vunpack.c.h.b16 %v685
      %v697 = vunpack.c.l.b16 %v686
      %v698 = vunpack.c.h.b16 %v686
      %v699 = vunpack.c.l.b16 %v687
      %v700 = vunpack.c.h.b16 %v687
      %v701 = vunpack.c.l.b16 %v688
      %v702 = vunpack.c.h.b16 %v688
      %v703 = vunpack.c.l.b16 %v689
      %v704 = vunpack.c.h.b16 %v689
      %v705 = vpack.c.b16 %v697, %v695
      %v706 = vpack.c.b16 %v698, %v696
      %v707 = vpack.c.b16 %v701, %v699
      %v708 = vpack.c.b16 %v702, %v700
      %v709 = vpack.c.b16 %v703, %v703
      %v710 = vpack.c.b16 %v704, %v704
      %vm715 = vcmask 269312
      %v717 = vsel %vm715, %v683, 0
      %vm719 = vcmask 1040384
      %v720 = vsel 0, 4294967295, 65535
      %v721 = vsel %vm719, %v720, 0
      %v723 = vand.u32 %v709, %v721
      %v726 = vand.u32 %v710, %v721
      %728 = vmatprep.subr.bf16.mxu0 %v706
      %729 = vmatpush1.bf16.msra.mxu0 %v705
      %730 = vmatprep.subr.bf16.mxu0 %v708
      %731 = vmatpush1.bf16.msra.mxu0 %v707
      %732 = vmatprep.subr.bf16.mxu0 %v726
      %733 = vmatpush1.bf16.msra.mxu0 %v723
      %734 = vmatprep.subr.bf16.mxu0 0
      %735 = vmatpush1.bf16.msra.mxu0 0
      %736 = vmatprep.subr.bf16.mxu0 0
      %737 = vmatpush1.bf16.msra.mxu0 0
      %738 = vmatprep.subr.bf16.mxu0 0
      %739 = vmatpush1.bf16.msra.mxu0 0
      %740 = vmatprep.subr.bf16.mxu0 0
      %741 = vmatpush1.bf16.msra.mxu0 0
      %742 = vmatprep.subr.bf16.mxu0 0
      %743 = vmatpush1.bf16.msra.mxu0 0
      %744 = vmatprep.subr.bf16.mxu0 0
      %745 = vmatpush1.bf16.msra.mxu0 0
      %746 = vmatprep.subr.bf16.mxu0 0
      %747 = vmatpush1.bf16.msra.mxu0 0
      %748 = vmatprep.subr.bf16.mxu0 0
      %749 = vmatpush1.bf16.msra.mxu0 0
      %750 = vmatprep.subr.bf16.mxu0 0
      %751 = vmatpush1.bf16.msra.mxu0 0
      %752 = vmatprep.subr.bf16.mxu0 0
      %753 = vmatpush1.bf16.msra.mxu0 0
      %754 = vmatprep.subr.bf16.mxu0 0
      %755 = vmatpush1.bf16.msra.mxu0 0
      %756 = vmatprep.subr.bf16.mxu0 0
      %757 = vmatpush1.bf16.msra.mxu0 0
      %758 = vmatprep.subr.bf16.mxu0 0
      %759 = vmatpush1.bf16.msra.mxu0 0
      %760 = vmatprep.mubr.bf16.mxu0 0
      %761 = vmatmul.mubr.bf16.gmra.mrb[0].mxu0 %v717
      %v762 = vpop.f32.mrb[0].mxu0
      %v763 = vadd.f32 0.0, %v762
      %v764 = vpop.f32.mrb[0].mxu0
      %v765 = vadd.f32 0.0, %v764
      %v766 = vpop.f32.mrb[0].mxu0
      %v767 = vpop.f32.mrb[0].mxu0
      %768 = vdwg.mxu0
      %v769 = vpack.c.bf16 %v763, %v763
      %v770 = vpack.c.bf16 %v765, %v765
      %v771 = vld [vmem:[%s2] sm:$0x3]
      %v774 = vunpack.c.l.s4 1966171168
      %v775 = vunpack.c.0.s8 %v774
      %v776 = vlaneseq
      %v777 = vshrl.u32 %v776, 7
      %v778 = vsub.s32 %v775, %v777
      %v779 = vrot.slane %v771, %v778
      %v780 = vcombine.high %v779, %v779
      %v782 = vunpack.c.l.s4 1966171168
      %v783 = vunpack.c.0.s8 %v782
      %v784 = vlaneseq
      %v785 = vshrl.u32 %v784, 7
      %v786 = vsub.s32 %v783, %v785
      %v787 = vrot.slane %v779, %v786
      %v789 = vunpack.c.l.s4 1966171168
      %v790 = vunpack.c.0.s8 %v789
      %v791 = vlaneseq
      %v792 = vshrl.u32 %v791, 7
      %v793 = vsub.s32 %v790, %v792
      %v794 = vrot.slane %v780, %v793
      %v796 = vpack.i.b16 %v787, %v787
      %v798 = vlaneseq
      %v799 = vshrl.u32 %v798, 7
      %v800 = vsub.s32 0, %v799
      %v801 = vrot.slane %v796, %v800
      %v803 = vpack.i.b16 %v794, %v794
      %v805 = vlaneseq
      %v806 = vshrl.u32 %v805, 7
      %v807 = vsub.s32 0, %v806
      %v808 = vrot.slane %v803, %v807
      %v809 = vadd.bf16 %v769, %v801
      %v810 = vadd.bf16 %v770, %v808
      %v811 = vmax.bf16 %v809, 0
      %v812 = vmax.bf16 %v810, 0
      %v813 = vld [vmem:[%s3] sm:$0xff]
      %v814 = vld [vmem:[%s3 + $0x8] sm:$0xff]
      %v815 = vld [vmem:[%s3 + $0x10] sm:$0xff]
      %v816 = vld [vmem:[%s3 + $0x18] sm:$0xff]
      %v817 = vld [vmem:[%s3 + $0x20] sm:$0xff]
      %v818 = vld [vmem:[%s3 + $0x28] sm:$0xff]
      %v819 = vld [vmem:[%s3 + $0x30] sm:$0xff]
      %v820 = vld [vmem:[%s3 + $0x38] sm:$0xff]
      %v821 = vld [vmem:[%s3 + $0x40] sm:$0xff]
      %v822 = vld [vmem:[%s3 + $0x48] sm:$0xff]
      %v823 = vld [vmem:[%s3 + $0x50] sm:$0xff]
      %v824 = vld [vmem:[%s3 + $0x58] sm:$0xff]
      %v825 = vld [vmem:[%s3 + $0x60] sm:$0xff]
      %v826 = vld [vmem:[%s3 + $0x68] sm:$0xff]
      %v827 = vld [vmem:[%s3 + $0x70] sm:$0xff]
      %v828 = vld [vmem:[%s3 + $0x78] sm:$0xff]
      %v829 = vld [vmem:[%s3 + $0x80] sm:$0xff]
      %v830 = vld [vmem:[%s3 + $0x88] sm:$0xff]
      %v831 = vld [vmem:[%s3 + $0x90] sm:$0xff]
      %v832 = vld [vmem:[%s3 + $0x98] sm:$0xff]
      %v833 = vld [vmem:[%s3 + $0xa0] sm:$0xff]
      %v834 = vld [vmem:[%s3 + $0xa8] sm:$0xff]
      %v835 = vld [vmem:[%s3 + $0xb0] sm:$0xff]
      %v836 = vld [vmem:[%s3 + $0xb8] sm:$0xff]
      %v837 = vld [vmem:[%s3 + $0xc0] sm:$0xff]
      %v838 = vld [vmem:[%s3 + $0xc8] sm:$0xff]
      %v839 = vld [vmem:[%s3 + $0xd0] sm:$0xff]
      %v840 = vld [vmem:[%s3 + $0xd8] sm:$0xff]
      %v841 = vld [vmem:[%s3 + $0xe0] sm:$0xff]
      %v842 = vld [vmem:[%s3 + $0xe8] sm:$0xff]
      %v843 = vld [vmem:[%s3 + $0xf0] sm:$0xff]
      %v844 = vld [vmem:[%s3 + $0xf8] sm:$0xff]
      %v877 = vunpack.c.l.b16 %v813
      %v878 = vunpack.c.h.b16 %v813
      %v879 = vunpack.c.l.b16 %v814
      %v880 = vunpack.c.h.b16 %v814
      %v881 = vunpack.c.l.b16 %v815
      %v882 = vunpack.c.h.b16 %v815
      %v883 = vunpack.c.l.b16 %v816
      %v884 = vunpack.c.h.b16 %v816
      %v885 = vunpack.c.l.b16 %v817
      %v886 = vunpack.c.h.b16 %v817
      %v887 = vunpack.c.l.b16 %v818
      %v888 = vunpack.c.h.b16 %v818
      %v889 = vunpack.c.l.b16 %v819
      %v890 = vunpack.c.h.b16 %v819
      %v891 = vunpack.c.l.b16 %v820
      %v892 = vunpack.c.h.b16 %v820
      %v893 = vunpack.c.l.b16 %v821
      %v894 = vunpack.c.h.b16 %v821
      %v895 = vunpack.c.l.b16 %v822
      %v896 = vunpack.c.h.b16 %v822
      %v897 = vunpack.c.l.b16 %v823
      %v898 = vunpack.c.h.b16 %v823
      %v899 = vunpack.c.l.b16 %v824
      %v900 = vunpack.c.h.b16 %v824
      %v901 = vunpack.c.l.b16 %v825
      %v902 = vunpack.c.h.b16 %v825
      %v903 = vunpack.c.l.b16 %v826
      %v904 = vunpack.c.h.b16 %v826
      %v905 = vunpack.c.l.b16 %v827
      %v906 = vunpack.c.h.b16 %v827
      %v907 = vunpack.c.l.b16 %v828
      %v908 = vunpack.c.h.b16 %v828
      %v909 = vunpack.c.l.b16 %v829
      %v910 = vunpack.c.h.b16 %v829
      %v911 = vunpack.c.l.b16 %v830
      %v912 = vunpack.c.h.b16 %v830
      %v913 = vunpack.c.l.b16 %v831
      %v914 = vunpack.c.h.b16 %v831
      %v915 = vunpack.c.l.b16 %v832
      %v916 = vunpack.c.h.b16 %v832
      %v917 = vunpack.c.l.b16 %v833
      %v918 = vunpack.c.h.b16 %v833
      %v919 = vunpack.c.l.b16 %v834
      %v920 = vunpack.c.h.b16 %v834
      %v921 = vunpack.c.l.b16 %v835
      %v922 = vunpack.c.h.b16 %v835
      %v923 = vunpack.c.l.b16 %v836
      %v924 = vunpack.c.h.b16 %v836
      %v925 = vunpack.c.l.b16 %v837
      %v926 = vunpack.c.h.b16 %v837
      %v927 = vunpack.c.l.b16 %v838
      %v928 = vunpack.c.h.b16 %v838
      %v929 = vunpack.c.l.b16 %v839
      %v930 = vunpack.c.h.b16 %v839
      %v931 = vunpack.c.l.b16 %v840
      %v932 = vunpack.c.h.b16 %v840
      %v933 = vunpack.c.l.b16 %v841
      %v934 = vunpack.c.h.b16 %v841
      %v935 = vunpack.c.l.b16 %v842
      %v936 = vunpack.c.h.b16 %v842
      %v937 = vunpack.c.l.b16 %v843
      %v938 = vunpack.c.h.b16 %v843
      %v939 = vunpack.c.l.b16 %v844
      %v940 = vunpack.c.h.b16 %v844
      %v941 = vpack.c.b16 %v879, %v877
      %v942 = vpack.c.b16 %v880, %v878
      %v943 = vpack.c.b16 %v883, %v881
      %v944 = vpack.c.b16 %v884, %v882
      %v945 = vpack.c.b16 %v887, %v885
      %v946 = vpack.c.b16 %v888, %v886
      %v947 = vpack.c.b16 %v891, %v889
      %v948 = vpack.c.b16 %v892, %v890
      %v949 = vpack.c.b16 %v895, %v893
      %v950 = vpack.c.b16 %v896, %v894
      %v951 = vpack.c.b16 %v899, %v897
      %v952 = vpack.c.b16 %v900, %v898
      %v953 = vpack.c.b16 %v903, %v901
      %v954 = vpack.c.b16 %v904, %v902
      %v955 = vpack.c.b16 %v907, %v905
      %v956 = vpack.c.b16 %v908, %v906
      %v957 = vpack.c.b16 %v911, %v909
      %v958 = vpack.c.b16 %v912, %v910
      %v959 = vpack.c.b16 %v915, %v913
      %v960 = vpack.c.b16 %v916, %v914
      %v961 = vpack.c.b16 %v919, %v917
      %v962 = vpack.c.b16 %v920, %v918
      %v963 = vpack.c.b16 %v923, %v921
      %v964 = vpack.c.b16 %v924, %v922
      %v965 = vpack.c.b16 %v927, %v925
      %v966 = vpack.c.b16 %v928, %v926
      %v967 = vpack.c.b16 %v931, %v929
      %v968 = vpack.c.b16 %v932, %v930
      %v969 = vpack.c.b16 %v935, %v933
      %v970 = vpack.c.b16 %v936, %v934
      %v971 = vpack.c.b16 %v939, %v937
      %v972 = vpack.c.b16 %v940, %v938
      %1005 = vmatprep.subr.bf16.mxu0 %v942
      %1006 = vmatpush1.bf16.msra.mxu0 %v941
      %1007 = vmatprep.subr.bf16.mxu0 %v944
      %1008 = vmatpush1.bf16.msra.mxu0 %v943
      %1009 = vmatprep.subr.bf16.mxu0 %v946
      %1010 = vmatpush1.bf16.msra.mxu0 %v945
      %1011 = vmatprep.subr.bf16.mxu0 %v948
      %1012 = vmatpush1.bf16.msra.mxu0 %v947
      %1013 = vmatprep.subr.bf16.mxu0 %v950
      %1014 = vmatpush1.bf16.msra.mxu0 %v949
      %1015 = vmatprep.subr.bf16.mxu0 %v952
      %1016 = vmatpush1.bf16.msra.mxu0 %v951
      %1017 = vmatprep.subr.bf16.mxu0 %v954
      %1018 = vmatpush1.bf16.msra.mxu0 %v953
      %1019 = vmatprep.subr.bf16.mxu0 %v956
      %1020 = vmatpush1.bf16.msra.mxu0 %v955
      %1021 = vmatprep.subr.bf16.mxu0 %v958
      %1022 = vmatpush1.bf16.msra.mxu0 %v957
      %1023 = vmatprep.subr.bf16.mxu0 %v960
      %1024 = vmatpush1.bf16.msra.mxu0 %v959
      %1025 = vmatprep.subr.bf16.mxu0 %v962
      %1026 = vmatpush1.bf16.msra.mxu0 %v961
      %1027 = vmatprep.subr.bf16.mxu0 %v964
      %1028 = vmatpush1.bf16.msra.mxu0 %v963
      %1029 = vmatprep.subr.bf16.mxu0 %v966
      %1030 = vmatpush1.bf16.msra.mxu0 %v965
      %1031 = vmatprep.subr.bf16.mxu0 %v968
      %1032 = vmatpush1.bf16.msra.mxu0 %v967
      %1033 = vmatprep.subr.bf16.mxu0 %v970
      %1034 = vmatpush1.bf16.msra.mxu0 %v969
      %1035 = vmatprep.subr.bf16.mxu0 %v972
      %1036 = vmatpush1.bf16.msra.mxu0 %v971
      %1037 = vmatprep.mubr.bf16.mxu0 %v812
      %1038 = vmatmul.mubr.bf16.gmra.mrb[0].mxu0 %v811
      %v1039 = vpop.f32.mrb[0].mxu0
      %v1040 = vadd.f32 0.0, %v1039
      %v1041 = vpop.f32.mrb[0].mxu0
      %v1042 = vadd.f32 0.0, %v1041
      %v1043 = vpop.f32.mrb[0].mxu0
      %v1044 = vpop.f32.mrb[0].mxu0
      %1045 = vdwg.mxu0
      %v1046 = vpack.c.bf16 %v1040, %v1040
      %v1047 = vpack.c.bf16 %v1042, %v1042
      %v1048 = vld [vmem:[%s4] sm:$0x3]
      %v1051 = vunpack.c.l.s4 1966171168
      %v1052 = vunpack.c.0.s8 %v1051
      %v1053 = vlaneseq
      %v1054 = vshrl.u32 %v1053, 7
      %v1055 = vsub.s32 %v1052, %v1054
      %v1056 = vrot.slane %v1048, %v1055
      %v1057 = vcombine.high %v1056, %v1056
      %v1059 = vunpack.c.l.s4 1966171168
      %v1060 = vunpack.c.0.s8 %v1059
      %v1061 = vlaneseq
      %v1062 = vshrl.u32 %v1061, 7
      %v1063 = vsub.s32 %v1060, %v1062
      %v1064 = vrot.slane %v1056, %v1063
      %v1066 = vunpack.c.l.s4 1966171168
      %v1067 = vunpack.c.0.s8 %v1066
      %v1068 = vlaneseq
      %v1069 = vshrl.u32 %v1068, 7
      %v1070 = vsub.s32 %v1067, %v1069
      %v1071 = vrot.slane %v1057, %v1070
      %v1073 = vpack.i.b16 %v1064, %v1064
      %v1075 = vlaneseq
      %v1076 = vshrl.u32 %v1075, 7
      %v1077 = vsub.s32 0, %v1076
      %v1078 = vrot.slane %v1073, %v1077
      %v1080 = vpack.i.b16 %v1071, %v1071
      %v1082 = vlaneseq
      %v1083 = vshrl.u32 %v1082, 7
      %v1084 = vsub.s32 0, %v1083
      %v1085 = vrot.slane %v1080, %v1084
      %v1086 = vadd.bf16 %v1046, %v1078
      %v1087 = vadd.bf16 %v1047, %v1085
      %v1088 = vmax.bf16 %v1086, 0
      %v1089 = vmax.bf16 %v1087, 0
      %v1090 = vld [vmem:[%s5] sm:$0xff]
      %v1091 = vld [vmem:[%s5 + $0x8] sm:$0xff]
      %v1092 = vld [vmem:[%s5 + $0x10] sm:$0xff]
      %v1093 = vld [vmem:[%s5 + $0x18] sm:$0xff]
      %v1094 = vld [vmem:[%s5 + $0x20] sm:$0xff]
      %v1095 = vld [vmem:[%s5 + $0x28] sm:$0xff]
      %v1096 = vld [vmem:[%s5 + $0x30] sm:$0xff]
      %v1097 = vld [vmem:[%s5 + $0x38] sm:$0xff]
      %v1098 = vld [vmem:[%s5 + $0x40] sm:$0xff]
      %v1099 = vld [vmem:[%s5 + $0x48] sm:$0xff]
      %v1100 = vld [vmem:[%s5 + $0x50] sm:$0xff]
      %v1101 = vld [vmem:[%s5 + $0x58] sm:$0xff]
      %v1102 = vld [vmem:[%s5 + $0x60] sm:$0xff]
      %v1103 = vld [vmem:[%s5 + $0x68] sm:$0xff]
      %v1104 = vld [vmem:[%s5 + $0x70] sm:$0xff]
      %v1105 = vld [vmem:[%s5 + $0x78] sm:$0xff]
      %v1106 = vld [vmem:[%s5 + $0x80] sm:$0xff]
      %v1107 = vld [vmem:[%s5 + $0x88] sm:$0xff]
      %v1108 = vld [vmem:[%s5 + $0x90] sm:$0xff]
      %v1109 = vld [vmem:[%s5 + $0x98] sm:$0xff]
      %v1110 = vld [vmem:[%s5 + $0xa0] sm:$0xff]
      %v1111 = vld [vmem:[%s5 + $0xa8] sm:$0xff]
      %v1112 = vld [vmem:[%s5 + $0xb0] sm:$0xff]
      %v1113 = vld [vmem:[%s5 + $0xb8] sm:$0xff]
      %v1114 = vld [vmem:[%s5 + $0xc0] sm:$0xff]
      %v1115 = vld [vmem:[%s5 + $0xc8] sm:$0xff]
      %v1116 = vld [vmem:[%s5 + $0xd0] sm:$0xff]
      %v1117 = vld [vmem:[%s5 + $0xd8] sm:$0xff]
      %v1118 = vld [vmem:[%s5 + $0xe0] sm:$0xff]
      %v1119 = vld [vmem:[%s5 + $0xe8] sm:$0xff]
      %v1120 = vld [vmem:[%s5 + $0xf0] sm:$0xff]
      %v1121 = vld [vmem:[%s5 + $0xf8] sm:$0xff]
      %v1122 = vld [vmem:[%s6] sm:$0xff]
      %v1123 = vld [vmem:[%s6 + $0x8] sm:$0xff]
      %v1124 = vld [vmem:[%s6 + $0x10] sm:$0xff]
      %v1125 = vld [vmem:[%s6 + $0x18] sm:$0xff]
      %v1126 = vld [vmem:[%s6 + $0x20] sm:$0x11]
      %v1132 = vunpack.c.l.b16 %v1122
      %v1133 = vunpack.c.h.b16 %v1122
      %v1134 = vunpack.c.l.b16 %v1123
      %v1135 = vunpack.c.h.b16 %v1123
      %v1136 = vunpack.c.l.b16 %v1124
      %v1137 = vunpack.c.h.b16 %v1124
      %v1138 = vunpack.c.l.b16 %v1125
      %v1139 = vunpack.c.h.b16 %v1125
      %v1140 = vunpack.c.l.b16 %v1126
      %v1141 = vunpack.c.h.b16 %v1126
      %v1142 = vpack.c.b16 %v1134, %v1132
      %v1143 = vpack.c.b16 %v1135, %v1133
      %v1144 = vpack.c.b16 %v1138, %v1136
      %v1145 = vpack.c.b16 %v1139, %v1137
      %v1146 = vpack.c.b16 %v1140, %v1140
      %v1147 = vpack.c.b16 %v1141, %v1141
      %v1153 = vsel %vm715, %v684, 0
      %v1156 = vand.u32 %v1146, %v721
      %v1159 = vand.u32 %v1147, %v721
      %1161 = vmatprep.subr.bf16.mxu0 %v1143
      %1162 = vmatpush1.bf16.msra.mxu0 %v1142
      %1163 = vmatprep.subr.bf16.mxu0 %v1145
      %1164 = vmatpush1.bf16.msra.mxu0 %v1144
      %1165 = vmatprep.subr.bf16.mxu0 %v1159
      %1166 = vmatpush1.bf16.msra.mxu0 %v1156
      %1167 = vmatprep.subr.bf16.mxu0 0
      %1168 = vmatpush1.bf16.msra.mxu0 0
      %1169 = vmatprep.subr.bf16.mxu0 0
      %1170 = vmatpush1.bf16.msra.mxu0 0
      %1171 = vmatprep.subr.bf16.mxu0 0
      %1172 = vmatpush1.bf16.msra.mxu0 0
      %1173 = vmatprep.subr.bf16.mxu0 0
      %1174 = vmatpush1.bf16.msra.mxu0 0
      %1175 = vmatprep.subr.bf16.mxu0 0
      %1176 = vmatpush1.bf16.msra.mxu0 0
      %1177 = vmatprep.subr.bf16.mxu0 0
      %1178 = vmatpush1.bf16.msra.mxu0 0
      %1179 = vmatprep.subr.bf16.mxu0 0
      %1180 = vmatpush1.bf16.msra.mxu0 0
      %1181 = vmatprep.subr.bf16.mxu0 0
      %1182 = vmatpush1.bf16.msra.mxu0 0
      %1183 = vmatprep.subr.bf16.mxu0 0
      %1184 = vmatpush1.bf16.msra.mxu0 0
      %1185 = vmatprep.subr.bf16.mxu0 0
      %1186 = vmatpush1.bf16.msra.mxu0 0
      %1187 = vmatprep.subr.bf16.mxu0 0
      %1188 = vmatpush1.bf16.msra.mxu0 0
      %1189 = vmatprep.subr.bf16.mxu0 0
      %1190 = vmatpush1.bf16.msra.mxu0 0
      %1191 = vmatprep.subr.bf16.mxu0 0
      %1192 = vmatpush1.bf16.msra.mxu0 0
      %1193 = vmatprep.mubr.bf16.mxu0 0
      %1194 = vmatmul.mubr.bf16.gmra.mrb[0].mxu0 %v1153
      %v1195 = vpop.f32.mrb[0].mxu0
      %v1196 = vadd.f32 0.0, %v1195
      %v1197 = vpop.f32.mrb[0].mxu0
      %v1198 = vadd.f32 0.0, %v1197
      %v1199 = vpop.f32.mrb[0].mxu0
      %v1200 = vpop.f32.mrb[0].mxu0
      %1201 = vdwg.mxu0
      %v1234 = vunpack.c.l.b16 %v1090
      %v1235 = vunpack.c.h.b16 %v1090
      %v1236 = vunpack.c.l.b16 %v1091
      %v1237 = vunpack.c.h.b16 %v1091
      %v1238 = vunpack.c.l.b16 %v1092
      %v1239 = vunpack.c.h.b16 %v1092
      %v1240 = vunpack.c.l.b16 %v1093
      %v1241 = vunpack.c.h.b16 %v1093
      %v1242 = vunpack.c.l.b16 %v1094
      %v1243 = vunpack.c.h.b16 %v1094
      %v1244 = vunpack.c.l.b16 %v1095
      %v1245 = vunpack.c.h.b16 %v1095
      %v1246 = vunpack.c.l.b16 %v1096
      %v1247 = vunpack.c.h.b16 %v1096
      %v1248 = vunpack.c.l.b16 %v1097
      %v1249 = vunpack.c.h.b16 %v1097
      %v1250 = vunpack.c.l.b16 %v1098
      %v1251 = vunpack.c.h.b16 %v1098
      %v1252 = vunpack.c.l.b16 %v1099
      %v1253 = vunpack.c.h.b16 %v1099
      %v1254 = vunpack.c.l.b16 %v1100
      %v1255 = vunpack.c.h.b16 %v1100
      %v1256 = vunpack.c.l.b16 %v1101
      %v1257 = vunpack.c.h.b16 %v1101
      %v1258 = vunpack.c.l.b16 %v1102
      %v1259 = vunpack.c.h.b16 %v1102
      %v1260 = vunpack.c.l.b16 %v1103
      %v1261 = vunpack.c.h.b16 %v1103
      %v1262 = vunpack.c.l.b16 %v1104
      %v1263 = vunpack.c.h.b16 %v1104
      %v1264 = vunpack.c.l.b16 %v1105
      %v1265 = vunpack.c.h.b16 %v1105
      %v1266 = vunpack.c.l.b16 %v1106
      %v1267 = vunpack.c.h.b16 %v1106
      %v1268 = vunpack.c.l.b16 %v1107
      %v1269 = vunpack.c.h.b16 %v1107
      %v1270 = vunpack.c.l.b16 %v1108
      %v1271 = vunpack.c.h.b16 %v1108
      %v1272 = vunpack.c.l.b16 %v1109
      %v1273 = vunpack.c.h.b16 %v1109
      %v1274 = vunpack.c.l.b16 %v1110
      %v1275 = vunpack.c.h.b16 %v1110
      %v1276 = vunpack.c.l.b16 %v1111
      %v1277 = vunpack.c.h.b16 %v1111
      %v1278 = vunpack.c.l.b16 %v1112
      %v1279 = vunpack.c.h.b16 %v1112
      %v1280 = vunpack.c.l.b16 %v1113
      %v1281 = vunpack.c.h.b16 %v1113
      %v1282 = vunpack.c.l.b16 %v1114
      %v1283 = vunpack.c.h.b16 %v1114
      %v1284 = vunpack.c.l.b16 %v1115
      %v1285 = vunpack.c.h.b16 %v1115
      %v1286 = vunpack.c.l.b16 %v1116
      %v1287 = vunpack.c.h.b16 %v1116
      %v1288 = vunpack.c.l.b16 %v1117
      %v1289 = vunpack.c.h.b16 %v1117
      %v1290 = vunpack.c.l.b16 %v1118
      %v1291 = vunpack.c.h.b16 %v1118
      %v1292 = vunpack.c.l.b16 %v1119
      %v1293 = vunpack.c.h.b16 %v1119
      %v1294 = vunpack.c.l.b16 %v1120
      %v1295 = vunpack.c.h.b16 %v1120
      %v1296 = vunpack.c.l.b16 %v1121
      %v1297 = vunpack.c.h.b16 %v1121
      %v1298 = vpack.c.b16 %v1236, %v1234
      %v1299 = vpack.c.b16 %v1237, %v1235
      %v1300 = vpack.c.b16 %v1240, %v1238
      %v1301 = vpack.c.b16 %v1241, %v1239
      %v1302 = vpack.c.b16 %v1244, %v1242
      %v1303 = vpack.c.b16 %v1245, %v1243
      %v1304 = vpack.c.b16 %v1248, %v1246
      %v1305 = vpack.c.b16 %v1249, %v1247
      %v1306 = vpack.c.b16 %v1252, %v1250
      %v1307 = vpack.c.b16 %v1253, %v1251
      %v1308 = vpack.c.b16 %v1256, %v1254
      %v1309 = vpack.c.b16 %v1257, %v1255
      %v1310 = vpack.c.b16 %v1260, %v1258
      %v1311 = vpack.c.b16 %v1261, %v1259
      %v1312 = vpack.c.b16 %v1264, %v1262
      %v1313 = vpack.c.b16 %v1265, %v1263
      %v1314 = vpack.c.b16 %v1268, %v1266
      %v1315 = vpack.c.b16 %v1269, %v1267
      %v1316 = vpack.c.b16 %v1272, %v1270
      %v1317 = vpack.c.b16 %v1273, %v1271
      %v1318 = vpack.c.b16 %v1276, %v1274
      %v1319 = vpack.c.b16 %v1277, %v1275
      %v1320 = vpack.c.b16 %v1280, %v1278
      %v1321 = vpack.c.b16 %v1281, %v1279
      %v1322 = vpack.c.b16 %v1284, %v1282
      %v1323 = vpack.c.b16 %v1285, %v1283
      %v1324 = vpack.c.b16 %v1288, %v1286
      %v1325 = vpack.c.b16 %v1289, %v1287
      %v1326 = vpack.c.b16 %v1292, %v1290
      %v1327 = vpack.c.b16 %v1293, %v1291
      %v1328 = vpack.c.b16 %v1296, %v1294
      %v1329 = vpack.c.b16 %v1297, %v1295
      %1362 = vmatprep.subr.bf16.mxu0 %v1299
      %1363 = vmatpush1.bf16.msra.mxu0 %v1298
      %1364 = vmatprep.subr.bf16.mxu0 %v1301
      %1365 = vmatpush1.bf16.msra.mxu0 %v1300
      %1366 = vmatprep.subr.bf16.mxu0 %v1303
      %1367 = vmatpush1.bf16.msra.mxu0 %v1302
      %1368 = vmatprep.subr.bf16.mxu0 %v1305
      %1369 = vmatpush1.bf16.msra.mxu0 %v1304
      %1370 = vmatprep.subr.bf16.mxu0 %v1307
      %1371 = vmatpush1.bf16.msra.mxu0 %v1306
      %1372 = vmatprep.subr.bf16.mxu0 %v1309
      %1373 = vmatpush1.bf16.msra.mxu0 %v1308
      %1374 = vmatprep.subr.bf16.mxu0 %v1311
      %1375 = vmatpush1.bf16.msra.mxu0 %v1310
      %1376 = vmatprep.subr.bf16.mxu0 %v1313
      %1377 = vmatpush1.bf16.msra.mxu0 %v1312
      %1378 = vmatprep.subr.bf16.mxu0 %v1315
      %1379 = vmatpush1.bf16.msra.mxu0 %v1314
      %1380 = vmatprep.subr.bf16.mxu0 %v1317
      %1381 = vmatpush1.bf16.msra.mxu0 %v1316
      %1382 = vmatprep.subr.bf16.mxu0 %v1319
      %1383 = vmatpush1.bf16.msra.mxu0 %v1318
      %1384 = vmatprep.subr.bf16.mxu0 %v1321
      %1385 = vmatpush1.bf16.msra.mxu0 %v1320
      %1386 = vmatprep.subr.bf16.mxu0 %v1323
      %1387 = vmatpush1.bf16.msra.mxu0 %v1322
      %1388 = vmatprep.subr.bf16.mxu0 %v1325
      %1389 = vmatpush1.bf16.msra.mxu0 %v1324
      %1390 = vmatprep.subr.bf16.mxu0 %v1327
      %1391 = vmatpush1.bf16.msra.mxu0 %v1326
      %1392 = vmatprep.subr.bf16.mxu0 %v1329
      %1393 = vmatpush1.bf16.msra.mxu0 %v1328
      %1394 = vmatprep.mubr.bf16.mxu0 %v1089
      %1395 = vmatmul.mubr.bf16.gmra.mrb[0].mxu0 %v1088
      %v1396 = vpop.f32.mrb[0].mxu0
      %v1397 = vadd.f32 %v1196, %v1396
      %v1398 = vpop.f32.mrb[0].mxu0
      %v1399 = vadd.f32 %v1198, %v1398
      %v1400 = vpop.f32.mrb[0].mxu0
      %v1401 = vpop.f32.mrb[0].mxu0
      %1402 = vdwg.mxu0
      %v1403 = vpack.c.bf16 %v1397, %v1397
      %v1404 = vpack.c.bf16 %v1399, %v1399
      %v1405 = vld [vmem:[%s7] sm:$0x3]
      %v1408 = vunpack.c.l.s4 1966171168
      %v1409 = vunpack.c.0.s8 %v1408
      %v1410 = vlaneseq
      %v1411 = vshrl.u32 %v1410, 7
      %v1412 = vsub.s32 %v1409, %v1411
      %v1413 = vrot.slane %v1405, %v1412
      %v1414 = vcombine.high %v1413, %v1413
      %v1416 = vunpack.c.l.s4 1966171168
      %v1417 = vunpack.c.0.s8 %v1416
      %v1418 = vlaneseq
      %v1419 = vshrl.u32 %v1418, 7
      %v1420 = vsub.s32 %v1417, %v1419
      %v1421 = vrot.slane %v1413, %v1420
      %v1423 = vunpack.c.l.s4 1966171168
      %v1424 = vunpack.c.0.s8 %v1423
      %v1425 = vlaneseq
      %v1426 = vshrl.u32 %v1425, 7
      %v1427 = vsub.s32 %v1424, %v1426
      %v1428 = vrot.slane %v1414, %v1427
      %v1430 = vpack.i.b16 %v1421, %v1421
      %v1432 = vlaneseq
      %v1433 = vshrl.u32 %v1432, 7
      %v1434 = vsub.s32 0, %v1433
      %v1435 = vrot.slane %v1430, %v1434
      %v1437 = vpack.i.b16 %v1428, %v1428
      %v1439 = vlaneseq
      %v1440 = vshrl.u32 %v1439, 7
      %v1441 = vsub.s32 0, %v1440
      %v1442 = vrot.slane %v1437, %v1441
      %v1443 = vadd.bf16 %v1403, %v1435
      %v1444 = vadd.bf16 %v1404, %v1442
      %v1445 = vmax.bf16 %v1443, 0
      %v1446 = vmax.bf16 %v1444, 0
      %v1447 = vld [vmem:[%s8] sm:$0xff]
      %v1448 = vld [vmem:[%s8 + $0x8] sm:$0xff]
      %v1449 = vld [vmem:[%s8 + $0x10] sm:$0xff]
      %v1450 = vld [vmem:[%s8 + $0x18] sm:$0xff]
      %v1451 = vld [vmem:[%s8 + $0x20] sm:$0xff]
      %v1452 = vld [vmem:[%s8 + $0x28] sm:$0xff]
      %v1453 = vld [vmem:[%s8 + $0x30] sm:$0xff]
      %v1454 = vld [vmem:[%s8 + $0x38] sm:$0xff]
      %v1455 = vld [vmem:[%s8 + $0x40] sm:$0xff]
      %v1456 = vld [vmem:[%s8 + $0x48] sm:$0xff]
      %v1457 = vld [vmem:[%s8 + $0x50] sm:$0xff]
      %v1458 = vld [vmem:[%s8 + $0x58] sm:$0xff]
      %v1459 = vld [vmem:[%s8 + $0x60] sm:$0xff]
      %v1460 = vld [vmem:[%s8 + $0x68] sm:$0xff]
      %v1461 = vld [vmem:[%s8 + $0x70] sm:$0xff]
      %v1462 = vld [vmem:[%s8 + $0x78] sm:$0xff]
      %v1463 = vld [vmem:[%s8 + $0x80] sm:$0xff]
      %v1464 = vld [vmem:[%s8 + $0x88] sm:$0xff]
      %v1465 = vld [vmem:[%s8 + $0x90] sm:$0xff]
      %v1466 = vld [vmem:[%s8 + $0x98] sm:$0xff]
      %v1467 = vld [vmem:[%s8 + $0xa0] sm:$0xff]
      %v1468 = vld [vmem:[%s8 + $0xa8] sm:$0xff]
      %v1469 = vld [vmem:[%s8 + $0xb0] sm:$0xff]
      %v1470 = vld [vmem:[%s8 + $0xb8] sm:$0xff]
      %v1471 = vld [vmem:[%s8 + $0xc0] sm:$0xff]
      %v1472 = vld [vmem:[%s8 + $0xc8] sm:$0xff]
      %v1473 = vld [vmem:[%s8 + $0xd0] sm:$0xff]
      %v1474 = vld [vmem:[%s8 + $0xd8] sm:$0xff]
      %v1475 = vld [vmem:[%s8 + $0xe0] sm:$0xff]
      %v1476 = vld [vmem:[%s8 + $0xe8] sm:$0xff]
      %v1477 = vld [vmem:[%s8 + $0xf0] sm:$0xff]
      %v1478 = vld [vmem:[%s8 + $0xf8] sm:$0xff]
      %v1511 = vunpack.c.l.b16 %v1447
      %v1512 = vunpack.c.h.b16 %v1447
      %v1513 = vunpack.c.l.b16 %v1448
      %v1514 = vunpack.c.h.b16 %v1448
      %v1515 = vunpack.c.l.b16 %v1449
      %v1516 = vunpack.c.h.b16 %v1449
      %v1517 = vunpack.c.l.b16 %v1450
      %v1518 = vunpack.c.h.b16 %v1450
      %v1519 = vunpack.c.l.b16 %v1451
      %v1520 = vunpack.c.h.b16 %v1451
      %v1521 = vunpack.c.l.b16 %v1452
      %v1522 = vunpack.c.h.b16 %v1452
      %v1523 = vunpack.c.l.b16 %v1453
      %v1524 = vunpack.c.h.b16 %v1453
      %v1525 = vunpack.c.l.b16 %v1454
      %v1526 = vunpack.c.h.b16 %v1454
      %v1527 = vunpack.c.l.b16 %v1455
      %v1528 = vunpack.c.h.b16 %v1455
      %v1529 = vunpack.c.l.b16 %v1456
      %v1530 = vunpack.c.h.b16 %v1456
      %v1531 = vunpack.c.l.b16 %v1457
      %v1532 = vunpack.c.h.b16 %v1457
      %v1533 = vunpack.c.l.b16 %v1458
      %v1534 = vunpack.c.h.b16 %v1458
      %v1535 = vunpack.c.l.b16 %v1459
      %v1536 = vunpack.c.h.b16 %v1459
      %v1537 = vunpack.c.l.b16 %v1460
      %v1538 = vunpack.c.h.b16 %v1460
      %v1539 = vunpack.c.l.b16 %v1461
      %v1540 = vunpack.c.h.b16 %v1461
      %v1541 = vunpack.c.l.b16 %v1462
      %v1542 = vunpack.c.h.b16 %v1462
      %v1543 = vunpack.c.l.b16 %v1463
      %v1544 = vunpack.c.h.b16 %v1463
      %v1545 = vunpack.c.l.b16 %v1464
      %v1546 = vunpack.c.h.b16 %v1464
      %v1547 = vunpack.c.l.b16 %v1465
      %v1548 = vunpack.c.h.b16 %v1465
      %v1549 = vunpack.c.l.b16 %v1466
      %v1550 = vunpack.c.h.b16 %v1466
      %v1551 = vunpack.c.l.b16 %v1467
      %v1552 = vunpack.c.h.b16 %v1467
      %v1553 = vunpack.c.l.b16 %v1468
      %v1554 = vunpack.c.h.b16 %v1468
      %v1555 = vunpack.c.l.b16 %v1469
      %v1556 = vunpack.c.h.b16 %v1469
      %v1557 = vunpack.c.l.b16 %v1470
      %v1558 = vunpack.c.h.b16 %v1470
      %v1559 = vunpack.c.l.b16 %v1471
      %v1560 = vunpack.c.h.b16 %v1471
      %v1561 = vunpack.c.l.b16 %v1472
      %v1562 = vunpack.c.h.b16 %v1472
      %v1563 = vunpack.c.l.b16 %v1473
      %v1564 = vunpack.c.h.b16 %v1473
      %v1565 = vunpack.c.l.b16 %v1474
      %v1566 = vunpack.c.h.b16 %v1474
      %v1567 = vunpack.c.l.b16 %v1475
      %v1568 = vunpack.c.h.b16 %v1475
      %v1569 = vunpack.c.l.b16 %v1476
      %v1570 = vunpack.c.h.b16 %v1476
      %v1571 = vunpack.c.l.b16 %v1477
      %v1572 = vunpack.c.h.b16 %v1477
      %v1573 = vunpack.c.l.b16 %v1478
      %v1574 = vunpack.c.h.b16 %v1478
      %v1575 = vpack.c.b16 %v1513, %v1511
      %v1576 = vpack.c.b16 %v1514, %v1512
      %v1577 = vpack.c.b16 %v1517, %v1515
      %v1578 = vpack.c.b16 %v1518, %v1516
      %v1579 = vpack.c.b16 %v1521, %v1519
      %v1580 = vpack.c.b16 %v1522, %v1520
      %v1581 = vpack.c.b16 %v1525, %v1523
      %v1582 = vpack.c.b16 %v1526, %v1524
      %v1583 = vpack.c.b16 %v1529, %v1527
      %v1584 = vpack.c.b16 %v1530, %v1528
      %v1585 = vpack.c.b16 %v1533, %v1531
      %v1586 = vpack.c.b16 %v1534, %v1532
      %v1587 = vpack.c.b16 %v1537, %v1535
      %v1588 = vpack.c.b16 %v1538, %v1536
      %v1589 = vpack.c.b16 %v1541, %v1539
      %v1590 = vpack.c.b16 %v1542, %v1540
      %v1591 = vpack.c.b16 %v1545, %v1543
      %v1592 = vpack.c.b16 %v1546, %v1544
      %v1593 = vpack.c.b16 %v1549, %v1547
      %v1594 = vpack.c.b16 %v1550, %v1548
      %v1595 = vpack.c.b16 %v1553, %v1551
      %v1596 = vpack.c.b16 %v1554, %v1552
      %v1597 = vpack.c.b16 %v1557, %v1555
      %v1598 = vpack.c.b16 %v1558, %v1556
      %v1599 = vpack.c.b16 %v1561, %v1559
      %v1600 = vpack.c.b16 %v1562, %v1560
      %v1601 = vpack.c.b16 %v1565, %v1563
      %v1602 = vpack.c.b16 %v1566, %v1564
      %v1603 = vpack.c.b16 %v1569, %v1567
      %v1604 = vpack.c.b16 %v1570, %v1568
      %v1605 = vpack.c.b16 %v1573, %v1571
      %v1606 = vpack.c.b16 %v1574, %v1572
      %1639 = vmatprep.subr.bf16.mxu0 %v1576
      %1640 = vmatpush1.bf16.msra.mxu0 %v1575
      %1641 = vmatprep.subr.bf16.mxu0 %v1578
      %1642 = vmatpush1.bf16.msra.mxu0 %v1577
      %1643 = vmatprep.subr.bf16.mxu0 %v1580
      %1644 = vmatpush1.bf16.msra.mxu0 %v1579
      %1645 = vmatprep.subr.bf16.mxu0 %v1582
      %1646 = vmatpush1.bf16.msra.mxu0 %v1581
      %1647 = vmatprep.subr.bf16.mxu0 %v1584
      %1648 = vmatpush1.bf16.msra.mxu0 %v1583
      %1649 = vmatprep.subr.bf16.mxu0 %v1586
      %1650 = vmatpush1.bf16.msra.mxu0 %v1585
      %1651 = vmatprep.subr.bf16.mxu0 %v1588
      %1652 = vmatpush1.bf16.msra.mxu0 %v1587
      %1653 = vmatprep.subr.bf16.mxu0 %v1590
      %1654 = vmatpush1.bf16.msra.mxu0 %v1589
      %1655 = vmatprep.subr.bf16.mxu0 %v1592
      %1656 = vmatpush1.bf16.msra.mxu0 %v1591
      %1657 = vmatprep.subr.bf16.mxu0 %v1594
      %1658 = vmatpush1.bf16.msra.mxu0 %v1593
      %1659 = vmatprep.subr.bf16.mxu0 %v1596
      %1660 = vmatpush1.bf16.msra.mxu0 %v1595
      %1661 = vmatprep.subr.bf16.mxu0 %v1598
      %1662 = vmatpush1.bf16.msra.mxu0 %v1597
      %1663 = vmatprep.subr.bf16.mxu0 %v1600
      %1664 = vmatpush1.bf16.msra.mxu0 %v1599
      %1665 = vmatprep.subr.bf16.mxu0 %v1602
      %1666 = vmatpush1.bf16.msra.mxu0 %v1601
      %1667 = vmatprep.subr.bf16.mxu0 %v1604
      %1668 = vmatpush1.bf16.msra.mxu0 %v1603
      %1669 = vmatprep.subr.bf16.mxu0 %v1606
      %1670 = vmatpush1.bf16.msra.mxu0 %v1605
      %1671 = vmatprep.mubr.bf16.mxu0 %v1446
      %1672 = vmatmul.mubr.bf16.gmra.mrb[0].mxu0 %v1445
      %v1673 = vpop.f32.mrb[0].mxu0
      %v1674 = vadd.f32 0.0, %v1673
      %v1675 = vpop.f32.mrb[0].mxu0
      %v1676 = vadd.f32 0.0, %v1675
      %v1677 = vpop.f32.mrb[0].mxu0
      %v1678 = vpop.f32.mrb[0].mxu0
      %1679 = vdwg.mxu0
      %v1680 = vpack.c.bf16 %v1674, %v1674
      %v1681 = vpack.c.bf16 %v1676, %v1676
      %v1682 = vld [vmem:[%s9] sm:$0x3]
      %v1685 = vunpack.c.l.s4 1966171168
      %v1686 = vunpack.c.0.s8 %v1685
      %v1687 = vlaneseq
      %v1688 = vshrl.u32 %v1687, 7
      %v1689 = vsub.s32 %v1686, %v1688
      %v1690 = vrot.slane %v1682, %v1689
      %v1691 = vcombine.high %v1690, %v1690
      %v1693 = vunpack.c.l.s4 1966171168
      %v1694 = vunpack.c.0.s8 %v1693
      %v1695 = vlaneseq
      %v1696 = vshrl.u32 %v1695, 7
      %v1697 = vsub.s32 %v1694, %v1696
      %v1698 = vrot.slane %v1690, %v1697
      %v1700 = vunpack.c.l.s4 1966171168
      %v1701 = vunpack.c.0.s8 %v1700
      %v1702 = vlaneseq
      %v1703 = vshrl.u32 %v1702, 7
      %v1704 = vsub.s32 %v1701, %v1703
      %v1705 = vrot.slane %v1691, %v1704
      %v1707 = vpack.i.b16 %v1698, %v1698
      %v1709 = vlaneseq
      %v1710 = vshrl.u32 %v1709, 7
      %v1711 = vsub.s32 0, %v1710
      %v1712 = vrot.slane %v1707, %v1711
      %v1714 = vpack.i.b16 %v1705, %v1705
      %v1716 = vlaneseq
      %v1717 = vshrl.u32 %v1716, 7
      %v1718 = vsub.s32 0, %v1717
      %v1719 = vrot.slane %v1714, %v1718
      %v1720 = vadd.bf16 %v1680, %v1712
      %v1721 = vadd.bf16 %v1681, %v1719
      %v1722 = vmax.bf16 %v1720, 0
      %v1723 = vmax.bf16 %v1721, 0
      %v1724 = vld [vmem:[%s10] sm:$0xff]
      %v1725 = vld [vmem:[%s10 + $0x8] sm:$0xff]
      %v1726 = vld [vmem:[%s10 + $0x10] sm:$0xff]
      %v1727 = vld [vmem:[%s10 + $0x18] sm:$0xff]
      %v1728 = vld [vmem:[%s10 + $0x20] sm:$0xff]
      %v1729 = vld [vmem:[%s10 + $0x28] sm:$0xff]
      %v1730 = vld [vmem:[%s10 + $0x30] sm:$0xff]
      %v1731 = vld [vmem:[%s10 + $0x38] sm:$0xff]
      %v1732 = vld [vmem:[%s10 + $0x40] sm:$0xff]
      %v1733 = vld [vmem:[%s10 + $0x48] sm:$0xff]
      %v1734 = vld [vmem:[%s10 + $0x50] sm:$0xff]
      %v1735 = vld [vmem:[%s10 + $0x58] sm:$0xff]
      %v1736 = vld [vmem:[%s10 + $0x60] sm:$0xff]
      %v1737 = vld [vmem:[%s10 + $0x68] sm:$0xff]
      %v1738 = vld [vmem:[%s10 + $0x70] sm:$0xff]
      %v1739 = vld [vmem:[%s10 + $0x78] sm:$0xff]
      %v1740 = vld [vmem:[%s10 + $0x80] sm:$0xff]
      %v1741 = vld [vmem:[%s10 + $0x88] sm:$0xff]
      %v1742 = vld [vmem:[%s10 + $0x90] sm:$0xff]
      %v1743 = vld [vmem:[%s10 + $0x98] sm:$0xff]
      %v1744 = vld [vmem:[%s10 + $0xa0] sm:$0xff]
      %v1745 = vld [vmem:[%s10 + $0xa8] sm:$0xff]
      %v1746 = vld [vmem:[%s10 + $0xb0] sm:$0xff]
      %v1747 = vld [vmem:[%s10 + $0xb8] sm:$0xff]
      %v1748 = vld [vmem:[%s10 + $0xc0] sm:$0xff]
      %v1749 = vld [vmem:[%s10 + $0xc8] sm:$0xff]
      %v1750 = vld [vmem:[%s10 + $0xd0] sm:$0xff]
      %v1751 = vld [vmem:[%s10 + $0xd8] sm:$0xff]
      %v1752 = vld [vmem:[%s10 + $0xe0] sm:$0xff]
      %v1753 = vld [vmem:[%s10 + $0xe8] sm:$0xff]
      %v1754 = vld [vmem:[%s10 + $0xf0] sm:$0xff]
      %v1755 = vld [vmem:[%s10 + $0xf8] sm:$0xff]
      %v1788 = vunpack.c.l.b16 %v1724
      %v1789 = vunpack.c.h.b16 %v1724
      %v1790 = vunpack.c.l.b16 %v1725
      %v1791 = vunpack.c.h.b16 %v1725
      %v1792 = vunpack.c.l.b16 %v1726
      %v1793 = vunpack.c.h.b16 %v1726
      %v1794 = vunpack.c.l.b16 %v1727
      %v1795 = vunpack.c.h.b16 %v1727
      %v1796 = vunpack.c.l.b16 %v1728
      %v1797 = vunpack.c.h.b16 %v1728
      %v1798 = vunpack.c.l.b16 %v1729
      %v1799 = vunpack.c.h.b16 %v1729
      %v1800 = vunpack.c.l.b16 %v1730
      %v1801 = vunpack.c.h.b16 %v1730
      %v1802 = vunpack.c.l.b16 %v1731
      %v1803 = vunpack.c.h.b16 %v1731
      %v1804 = vunpack.c.l.b16 %v1732
      %v1805 = vunpack.c.h.b16 %v1732
      %v1806 = vunpack.c.l.b16 %v1733
      %v1807 = vunpack.c.h.b16 %v1733
      %v1808 = vunpack.c.l.b16 %v1734
      %v1809 = vunpack.c.h.b16 %v1734
      %v1810 = vunpack.c.l.b16 %v1735
      %v1811 = vunpack.c.h.b16 %v1735
      %v1812 = vunpack.c.l.b16 %v1736
      %v1813 = vunpack.c.h.b16 %v1736
      %v1814 = vunpack.c.l.b16 %v1737
      %v1815 = vunpack.c.h.b16 %v1737
      %v1816 = vunpack.c.l.b16 %v1738
      %v1817 = vunpack.c.h.b16 %v1738
      %v1818 = vunpack.c.l.b16 %v1739
      %v1819 = vunpack.c.h.b16 %v1739
      %v1820 = vunpack.c.l.b16 %v1740
      %v1821 = vunpack.c.h.b16 %v1740
      %v1822 = vunpack.c.l.b16 %v1741
      %v1823 = vunpack.c.h.b16 %v1741
      %v1824 = vunpack.c.l.b16 %v1742
      %v1825 = vunpack.c.h.b16 %v1742
      %v1826 = vunpack.c.l.b16 %v1743
      %v1827 = vunpack.c.h.b16 %v1743
      %v1828 = vunpack.c.l.b16 %v1744
      %v1829 = vunpack.c.h.b16 %v1744
      %v1830 = vunpack.c.l.b16 %v1745
      %v1831 = vunpack.c.h.b16 %v1745
      %v1832 = vunpack.c.l.b16 %v1746
      %v1833 = vunpack.c.h.b16 %v1746
      %v1834 = vunpack.c.l.b16 %v1747
      %v1835 = vunpack.c.h.b16 %v1747
      %v1836 = vunpack.c.l.b16 %v1748
      %v1837 = vunpack.c.h.b16 %v1748
      %v1838 = vunpack.c.l.b16 %v1749
      %v1839 = vunpack.c.h.b16 %v1749
      %v1840 = vunpack.c.l.b16 %v1750
      %v1841 = vunpack.c.h.b16 %v1750
      %v1842 = vunpack.c.l.b16 %v1751
      %v1843 = vunpack.c.h.b16 %v1751
      %v1844 = vunpack.c.l.b16 %v1752
      %v1845 = vunpack.c.h.b16 %v1752
      %v1846 = vunpack.c.l.b16 %v1753
      %v1847 = vunpack.c.h.b16 %v1753
      %v1848 = vunpack.c.l.b16 %v1754
      %v1849 = vunpack.c.h.b16 %v1754
      %v1850 = vunpack.c.l.b16 %v1755
      %v1851 = vunpack.c.h.b16 %v1755
      %v1852 = vpack.c.b16 %v1790, %v1788
      %v1853 = vpack.c.b16 %v1791, %v1789
      %v1854 = vpack.c.b16 %v1794, %v1792
      %v1855 = vpack.c.b16 %v1795, %v1793
      %v1856 = vpack.c.b16 %v1798, %v1796
      %v1857 = vpack.c.b16 %v1799, %v1797
      %v1858 = vpack.c.b16 %v1802, %v1800
      %v1859 = vpack.c.b16 %v1803, %v1801
      %v1860 = vpack.c.b16 %v1806, %v1804
      %v1861 = vpack.c.b16 %v1807, %v1805
      %v1862 = vpack.c.b16 %v1810, %v1808
      %v1863 = vpack.c.b16 %v1811, %v1809
      %v1864 = vpack.c.b16 %v1814, %v1812
      %v1865 = vpack.c.b16 %v1815, %v1813
      %v1866 = vpack.c.b16 %v1818, %v1816
      %v1867 = vpack.c.b16 %v1819, %v1817
      %v1868 = vpack.c.b16 %v1822, %v1820
      %v1869 = vpack.c.b16 %v1823, %v1821
      %v1870 = vpack.c.b16 %v1826, %v1824
      %v1871 = vpack.c.b16 %v1827, %v1825
      %v1872 = vpack.c.b16 %v1830, %v1828
      %v1873 = vpack.c.b16 %v1831, %v1829
      %v1874 = vpack.c.b16 %v1834, %v1832
      %v1875 = vpack.c.b16 %v1835, %v1833
      %v1876 = vpack.c.b16 %v1838, %v1836
      %v1877 = vpack.c.b16 %v1839, %v1837
      %v1878 = vpack.c.b16 %v1842, %v1840
      %v1879 = vpack.c.b16 %v1843, %v1841
      %v1880 = vpack.c.b16 %v1846, %v1844
      %v1881 = vpack.c.b16 %v1847, %v1845
      %v1882 = vpack.c.b16 %v1850, %v1848
      %v1883 = vpack.c.b16 %v1851, %v1849
      %1916 = vmatprep.subr.bf16.mxu0 %v1853
      %1917 = vmatpush1.bf16.msra.mxu0 %v1852
      %1918 = vmatprep.subr.bf16.mxu0 %v1855
      %1919 = vmatpush1.bf16.msra.mxu0 %v1854
      %1920 = vmatprep.subr.bf16.mxu0 %v1857
      %1921 = vmatpush1.bf16.msra.mxu0 %v1856
      %1922 = vmatprep.subr.bf16.mxu0 %v1859
      %1923 = vmatpush1.bf16.msra.mxu0 %v1858
      %1924 = vmatprep.subr.bf16.mxu0 %v1861
      %1925 = vmatpush1.bf16.msra.mxu0 %v1860
      %1926 = vmatprep.subr.bf16.mxu0 %v1863
      %1927 = vmatpush1.bf16.msra.mxu0 %v1862
      %1928 = vmatprep.subr.bf16.mxu0 %v1865
      %1929 = vmatpush1.bf16.msra.mxu0 %v1864
      %1930 = vmatprep.subr.bf16.mxu0 %v1867
      %1931 = vmatpush1.bf16.msra.mxu0 %v1866
      %1932 = vmatprep.subr.bf16.mxu0 %v1869
      %1933 = vmatpush1.bf16.msra.mxu0 %v1868
      %1934 = vmatprep.subr.bf16.mxu0 %v1871
      %1935 = vmatpush1.bf16.msra.mxu0 %v1870
      %1936 = vmatprep.subr.bf16.mxu0 %v1873
      %1937 = vmatpush1.bf16.msra.mxu0 %v1872
      %1938 = vmatprep.subr.bf16.mxu0 %v1875
      %1939 = vmatpush1.bf16.msra.mxu0 %v1874
      %1940 = vmatprep.subr.bf16.mxu0 %v1877
      %1941 = vmatpush1.bf16.msra.mxu0 %v1876
      %1942 = vmatprep.subr.bf16.mxu0 %v1879
      %1943 = vmatpush1.bf16.msra.mxu0 %v1878
      %1944 = vmatprep.subr.bf16.mxu0 %v1881
      %1945 = vmatpush1.bf16.msra.mxu0 %v1880
      %1946 = vmatprep.subr.bf16.mxu0 %v1883
      %1947 = vmatpush1.bf16.msra.mxu0 %v1882
      %1948 = vmatprep.mubr.bf16.mxu0 %v1723
      %1949 = vmatmul.mubr.bf16.gmra.mrb[0].mxu0 %v1722
      %v1950 = vpop.f32.mrb[0].mxu0
      %v1951 = vadd.f32 0.0, %v1950
      %v1952 = vpop.f32.mrb[0].mxu0
      %v1953 = vadd.f32 0.0, %v1952
      %v1954 = vpop.f32.mrb[0].mxu0
      %v1955 = vpop.f32.mrb[0].mxu0
      %1956 = vdwg.mxu0
      %v1957 = vpack.c.bf16 %v1951, %v1951
      %v1958 = vpack.c.bf16 %v1953, %v1953
      %v1959 = vld [vmem:[%s11] sm:$0x3]
      %v1962 = vunpack.c.l.s4 1966171168
      %v1963 = vunpack.c.0.s8 %v1962
      %v1964 = vlaneseq
      %v1965 = vshrl.u32 %v1964, 7
      %v1966 = vsub.s32 %v1963, %v1965
      %v1967 = vrot.slane %v1959, %v1966
      %v1968 = vcombine.high %v1967, %v1967
      %v1970 = vunpack.c.l.s4 1966171168
      %v1971 = vunpack.c.0.s8 %v1970
      %v1972 = vlaneseq
      %v1973 = vshrl.u32 %v1972, 7
      %v1974 = vsub.s32 %v1971, %v1973
      %v1975 = vrot.slane %v1967, %v1974
      %v1977 = vunpack.c.l.s4 1966171168
      %v1978 = vunpack.c.0.s8 %v1977
      %v1979 = vlaneseq
      %v1980 = vshrl.u32 %v1979, 7
      %v1981 = vsub.s32 %v1978, %v1980
      %v1982 = vrot.slane %v1968, %v1981
      %v1984 = vpack.i.b16 %v1975, %v1975
      %v1986 = vlaneseq
      %v1987 = vshrl.u32 %v1986, 7
      %v1988 = vsub.s32 0, %v1987
      %v1989 = vrot.slane %v1984, %v1988
      %v1991 = vpack.i.b16 %v1982, %v1982
      %v1993 = vlaneseq
      %v1994 = vshrl.u32 %v1993, 7
      %v1995 = vsub.s32 0, %v1994
      %v1996 = vrot.slane %v1991, %v1995
      %v1997 = vadd.bf16 %v1957, %v1989
      %v1998 = vadd.bf16 %v1958, %v1996
      %v1999 = vmax.bf16 %v1997, 0
      %v2000 = vmax.bf16 %v1998, 0
      %v2001 = vld [vmem:[%s12] sm:$0xff]
      %v2002 = vld [vmem:[%s12 + $0x8] sm:$0xff]
      %v2003 = vld [vmem:[%s12 + $0x10] sm:$0xff]
      %v2004 = vld [vmem:[%s12 + $0x18] sm:$0xff]
      %v2005 = vld [vmem:[%s12 + $0x20] sm:$0xff]
      %v2006 = vld [vmem:[%s12 + $0x28] sm:$0xff]
      %v2007 = vld [vmem:[%s12 + $0x30] sm:$0xff]
      %v2008 = vld [vmem:[%s12 + $0x38] sm:$0xff]
      %v2009 = vld [vmem:[%s12 + $0x40] sm:$0xff]
      %v2010 = vld [vmem:[%s12 + $0x48] sm:$0xff]
      %v2011 = vld [vmem:[%s12 + $0x50] sm:$0xff]
      %v2012 = vld [vmem:[%s12 + $0x58] sm:$0xff]
      %v2013 = vld [vmem:[%s12 + $0x60] sm:$0xff]
      %v2014 = vld [vmem:[%s12 + $0x68] sm:$0xff]
      %v2015 = vld [vmem:[%s12 + $0x70] sm:$0xff]
      %v2016 = vld [vmem:[%s12 + $0x78] sm:$0xff]
      %v2017 = vld [vmem:[%s12 + $0x80] sm:$0xff]
      %v2018 = vld [vmem:[%s12 + $0x88] sm:$0xff]
      %v2019 = vld [vmem:[%s12 + $0x90] sm:$0xff]
      %v2020 = vld [vmem:[%s12 + $0x98] sm:$0xff]
      %v2021 = vld [vmem:[%s12 + $0xa0] sm:$0xff]
      %v2022 = vld [vmem:[%s12 + $0xa8] sm:$0xff]
      %v2023 = vld [vmem:[%s12 + $0xb0] sm:$0xff]
      %v2024 = vld [vmem:[%s12 + $0xb8] sm:$0xff]
      %v2025 = vld [vmem:[%s12 + $0xc0] sm:$0xff]
      %v2026 = vld [vmem:[%s12 + $0xc8] sm:$0xff]
      %v2027 = vld [vmem:[%s12 + $0xd0] sm:$0xff]
      %v2028 = vld [vmem:[%s12 + $0xd8] sm:$0xff]
      %v2029 = vld [vmem:[%s12 + $0xe0] sm:$0xff]
      %v2030 = vld [vmem:[%s12 + $0xe8] sm:$0xff]
      %v2031 = vld [vmem:[%s12 + $0xf0] sm:$0xff]
      %v2032 = vld [vmem:[%s12 + $0xf8] sm:$0xff]
      %v2065 = vunpack.c.l.b16 %v2001
      %v2066 = vunpack.c.h.b16 %v2001
      %v2067 = vunpack.c.l.b16 %v2002
      %v2068 = vunpack.c.h.b16 %v2002
      %v2069 = vunpack.c.l.b16 %v2003
      %v2070 = vunpack.c.h.b16 %v2003
      %v2071 = vunpack.c.l.b16 %v2004
      %v2072 = vunpack.c.h.b16 %v2004
      %v2073 = vunpack.c.l.b16 %v2005
      %v2074 = vunpack.c.h.b16 %v2005
      %v2075 = vunpack.c.l.b16 %v2006
      %v2076 = vunpack.c.h.b16 %v2006
      %v2077 = vunpack.c.l.b16 %v2007
      %v2078 = vunpack.c.h.b16 %v2007
      %v2079 = vunpack.c.l.b16 %v2008
      %v2080 = vunpack.c.h.b16 %v2008
      %v2081 = vunpack.c.l.b16 %v2009
      %v2082 = vunpack.c.h.b16 %v2009
      %v2083 = vunpack.c.l.b16 %v2010
      %v2084 = vunpack.c.h.b16 %v2010
      %v2085 = vunpack.c.l.b16 %v2011
      %v2086 = vunpack.c.h.b16 %v2011
      %v2087 = vunpack.c.l.b16 %v2012
      %v2088 = vunpack.c.h.b16 %v2012
      %v2089 = vunpack.c.l.b16 %v2013
      %v2090 = vunpack.c.h.b16 %v2013
      %v2091 = vunpack.c.l.b16 %v2014
      %v2092 = vunpack.c.h.b16 %v2014
      %v2093 = vunpack.c.l.b16 %v2015
      %v2094 = vunpack.c.h.b16 %v2015
      %v2095 = vunpack.c.l.b16 %v2016
      %v2096 = vunpack.c.h.b16 %v2016
      %v2097 = vunpack.c.l.b16 %v2017
      %v2098 = vunpack.c.h.b16 %v2017
      %v2099 = vunpack.c.l.b16 %v2018
      %v2100 = vunpack.c.h.b16 %v2018
      %v2101 = vunpack.c.l.b16 %v2019
      %v2102 = vunpack.c.h.b16 %v2019
      %v2103 = vunpack.c.l.b16 %v2020
      %v2104 = vunpack.c.h.b16 %v2020
      %v2105 = vunpack.c.l.b16 %v2021
      %v2106 = vunpack.c.h.b16 %v2021
      %v2107 = vunpack.c.l.b16 %v2022
      %v2108 = vunpack.c.h.b16 %v2022
      %v2109 = vunpack.c.l.b16 %v2023
      %v2110 = vunpack.c.h.b16 %v2023
      %v2111 = vunpack.c.l.b16 %v2024
      %v2112 = vunpack.c.h.b16 %v2024
      %v2113 = vunpack.c.l.b16 %v2025
      %v2114 = vunpack.c.h.b16 %v2025
      %v2115 = vunpack.c.l.b16 %v2026
      %v2116 = vunpack.c.h.b16 %v2026
      %v2117 = vunpack.c.l.b16 %v2027
      %v2118 = vunpack.c.h.b16 %v2027
      %v2119 = vunpack.c.l.b16 %v2028
      %v2120 = vunpack.c.h.b16 %v2028
      %v2121 = vunpack.c.l.b16 %v2029
      %v2122 = vunpack.c.h.b16 %v2029
      %v2123 = vunpack.c.l.b16 %v2030
      %v2124 = vunpack.c.h.b16 %v2030
      %v2125 = vunpack.c.l.b16 %v2031
      %v2126 = vunpack.c.h.b16 %v2031
      %v2127 = vunpack.c.l.b16 %v2032
      %v2128 = vunpack.c.h.b16 %v2032
      %v2129 = vpack.c.b16 %v2067, %v2065
      %v2130 = vpack.c.b16 %v2068, %v2066
      %v2131 = vpack.c.b16 %v2071, %v2069
      %v2132 = vpack.c.b16 %v2072, %v2070
      %v2133 = vpack.c.b16 %v2075, %v2073
      %v2134 = vpack.c.b16 %v2076, %v2074
      %v2135 = vpack.c.b16 %v2079, %v2077
      %v2136 = vpack.c.b16 %v2080, %v2078
      %v2137 = vpack.c.b16 %v2083, %v2081
      %v2138 = vpack.c.b16 %v2084, %v2082
      %v2139 = vpack.c.b16 %v2087, %v2085
      %v2140 = vpack.c.b16 %v2088, %v2086
      %v2141 = vpack.c.b16 %v2091, %v2089
      %v2142 = vpack.c.b16 %v2092, %v2090
      %v2143 = vpack.c.b16 %v2095, %v2093
      %v2144 = vpack.c.b16 %v2096, %v2094
      %v2145 = vpack.c.b16 %v2099, %v2097
      %v2146 = vpack.c.b16 %v2100, %v2098
      %v2147 = vpack.c.b16 %v2103, %v2101
      %v2148 = vpack.c.b16 %v2104, %v2102
      %v2149 = vpack.c.b16 %v2107, %v2105
      %v2150 = vpack.c.b16 %v2108, %v2106
      %v2151 = vpack.c.b16 %v2111, %v2109
      %v2152 = vpack.c.b16 %v2112, %v2110
      %v2153 = vpack.c.b16 %v2115, %v2113
      %v2154 = vpack.c.b16 %v2116, %v2114
      %v2155 = vpack.c.b16 %v2119, %v2117
      %v2156 = vpack.c.b16 %v2120, %v2118
      %v2157 = vpack.c.b16 %v2123, %v2121
      %v2158 = vpack.c.b16 %v2124, %v2122
      %v2159 = vpack.c.b16 %v2127, %v2125
      %v2160 = vpack.c.b16 %v2128, %v2126
      %2193 = vmatprep.subr.bf16.mxu0 %v2130
      %2194 = vmatpush1.bf16.msra.mxu0 %v2129
      %2195 = vmatprep.subr.bf16.mxu0 %v2132
      %2196 = vmatpush1.bf16.msra.mxu0 %v2131
      %2197 = vmatprep.subr.bf16.mxu0 %v2134
      %2198 = vmatpush1.bf16.msra.mxu0 %v2133
      %2199 = vmatprep.subr.bf16.mxu0 %v2136
      %2200 = vmatpush1.bf16.msra.mxu0 %v2135
      %2201 = vmatprep.subr.bf16.mxu0 %v2138
      %2202 = vmatpush1.bf16.msra.mxu0 %v2137
      %2203 = vmatprep.subr.bf16.mxu0 %v2140
      %2204 = vmatpush1.bf16.msra.mxu0 %v2139
      %2205 = vmatprep.subr.bf16.mxu0 %v2142
      %2206 = vmatpush1.bf16.msra.mxu0 %v2141
      %2207 = vmatprep.subr.bf16.mxu0 %v2144
      %2208 = vmatpush1.bf16.msra.mxu0 %v2143
      %2209 = vmatprep.subr.bf16.mxu0 %v2146
      %2210 = vmatpush1.bf16.msra.mxu0 %v2145
      %2211 = vmatprep.subr.bf16.mxu0 %v2148
      %2212 = vmatpush1.bf16.msra.mxu0 %v2147
      %2213 = vmatprep.subr.bf16.mxu0 %v2150
      %2214 = vmatpush1.bf16.msra.mxu0 %v2149
      %2215 = vmatprep.subr.bf16.mxu0 %v2152
      %2216 = vmatpush1.bf16.msra.mxu0 %v2151
      %2217 = vmatprep.subr.bf16.mxu0 %v2154
      %2218 = vmatpush1.bf16.msra.mxu0 %v2153
      %2219 = vmatprep.subr.bf16.mxu0 %v2156
      %2220 = vmatpush1.bf16.msra.mxu0 %v2155
      %2221 = vmatprep.subr.bf16.mxu0 %v2158
      %2222 = vmatpush1.bf16.msra.mxu0 %v2157
      %2223 = vmatprep.subr.bf16.mxu0 %v2160
      %2224 = vmatpush1.bf16.msra.mxu0 %v2159
      %2225 = vmatprep.mubr.bf16.mxu0 %v2000
      %2226 = vmatmul.mubr.bf16.gmra.mrb[0].mxu0 %v1999
      %v2227 = vpop.f32.mrb[0].mxu0
      %v2228 = vadd.f32 0.0, %v2227
      %v2229 = vpop.f32.mrb[0].mxu0
      %v2230 = vadd.f32 0.0, %v2229
      %v2231 = vpop.f32.mrb[0].mxu0
      %v2232 = vpop.f32.mrb[0].mxu0
      %2233 = vdwg.mxu0
      %v2234 = vpack.c.bf16 %v2228, %v2228
      %v2235 = vpack.c.bf16 %v2230, %v2230
      %v2236 = vld [vmem:[%s13] sm:$0x3]
      %v2239 = vunpack.c.l.s4 1966171168
      %v2240 = vunpack.c.0.s8 %v2239
      %v2241 = vlaneseq
      %v2242 = vshrl.u32 %v2241, 7
      %v2243 = vsub.s32 %v2240, %v2242
      %v2244 = vrot.slane %v2236, %v2243
      %v2245 = vcombine.high %v2244, %v2244
      %v2247 = vunpack.c.l.s4 1966171168
      %v2248 = vunpack.c.0.s8 %v2247
      %v2249 = vlaneseq
      %v2250 = vshrl.u32 %v2249, 7
      %v2251 = vsub.s32 %v2248, %v2250
      %v2252 = vrot.slane %v2244, %v2251
      %v2254 = vunpack.c.l.s4 1966171168
      %v2255 = vunpack.c.0.s8 %v2254
      %v2256 = vlaneseq
      %v2257 = vshrl.u32 %v2256, 7
      %v2258 = vsub.s32 %v2255, %v2257
      %v2259 = vrot.slane %v2245, %v2258
      %v2261 = vpack.i.b16 %v2252, %v2252
      %v2263 = vlaneseq
      %v2264 = vshrl.u32 %v2263, 7
      %v2265 = vsub.s32 0, %v2264
      %v2266 = vrot.slane %v2261, %v2265
      %v2268 = vpack.i.b16 %v2259, %v2259
      %v2270 = vlaneseq
      %v2271 = vshrl.u32 %v2270, 7
      %v2272 = vsub.s32 0, %v2271
      %v2273 = vrot.slane %v2268, %v2272
      %v2274 = vadd.bf16 %v2234, %v2266
      %v2275 = vadd.bf16 %v2235, %v2273
      %v2276 = vmax.bf16 %v2274, 0
      %v2277 = vmax.bf16 %v2275, 0
      %v2278 = vld [vmem:[%s14] sm:$0xff]
      %v2279 = vld [vmem:[%s14 + $0x8] sm:$0xff]
      %v2280 = vld [vmem:[%s14 + $0x10] sm:$0xff]
      %v2281 = vld [vmem:[%s14 + $0x18] sm:$0xff]
      %v2282 = vld [vmem:[%s14 + $0x20] sm:$0xff]
      %v2283 = vld [vmem:[%s14 + $0x28] sm:$0xff]
      %v2284 = vld [vmem:[%s14 + $0x30] sm:$0xff]
      %v2285 = vld [vmem:[%s14 + $0x38] sm:$0xff]
      %v2286 = vld [vmem:[%s14 + $0x40] sm:$0xff]
      %v2287 = vld [vmem:[%s14 + $0x48] sm:$0xff]
      %v2288 = vld [vmem:[%s14 + $0x50] sm:$0xff]
      %v2289 = vld [vmem:[%s14 + $0x58] sm:$0xff]
      %v2290 = vld [vmem:[%s14 + $0x60] sm:$0xff]
      %v2291 = vld [vmem:[%s14 + $0x68] sm:$0xff]
      %v2292 = vld [vmem:[%s14 + $0x70] sm:$0xff]
      %v2293 = vld [vmem:[%s14 + $0x78] sm:$0xff]
      %v2294 = vld [vmem:[%s14 + $0x80] sm:$0xff]
      %v2295 = vld [vmem:[%s14 + $0x88] sm:$0xff]
      %v2296 = vld [vmem:[%s14 + $0x90] sm:$0xff]
      %v2297 = vld [vmem:[%s14 + $0x98] sm:$0xff]
      %v2298 = vld [vmem:[%s14 + $0xa0] sm:$0xff]
      %v2299 = vld [vmem:[%s14 + $0xa8] sm:$0xff]
      %v2300 = vld [vmem:[%s14 + $0xb0] sm:$0xff]
      %v2301 = vld [vmem:[%s14 + $0xb8] sm:$0xff]
      %v2302 = vld [vmem:[%s14 + $0xc0] sm:$0xff]
      %v2303 = vld [vmem:[%s14 + $0xc8] sm:$0xff]
      %v2304 = vld [vmem:[%s14 + $0xd0] sm:$0xff]
      %v2305 = vld [vmem:[%s14 + $0xd8] sm:$0xff]
      %v2306 = vld [vmem:[%s14 + $0xe0] sm:$0xff]
      %v2307 = vld [vmem:[%s14 + $0xe8] sm:$0xff]
      %v2308 = vld [vmem:[%s14 + $0xf0] sm:$0xff]
      %v2309 = vld [vmem:[%s14 + $0xf8] sm:$0xff]
      %v2342 = vunpack.c.l.b16 %v2278
      %v2343 = vunpack.c.h.b16 %v2278
      %v2344 = vunpack.c.l.b16 %v2279
      %v2345 = vunpack.c.h.b16 %v2279
      %v2346 = vunpack.c.l.b16 %v2280
      %v2347 = vunpack.c.h.b16 %v2280
      %v2348 = vunpack.c.l.b16 %v2281
      %v2349 = vunpack.c.h.b16 %v2281
      %v2350 = vunpack.c.l.b16 %v2282
      %v2351 = vunpack.c.h.b16 %v2282
      %v2352 = vunpack.c.l.b16 %v2283
      %v2353 = vunpack.c.h.b16 %v2283
      %v2354 = vunpack.c.l.b16 %v2284
      %v2355 = vunpack.c.h.b16 %v2284
      %v2356 = vunpack.c.l.b16 %v2285
      %v2357 = vunpack.c.h.b16 %v2285
      %v2358 = vunpack.c.l.b16 %v2286
      %v2359 = vunpack.c.h.b16 %v2286
      %v2360 = vunpack.c.l.b16 %v2287
      %v2361 = vunpack.c.h.b16 %v2287
      %v2362 = vunpack.c.l.b16 %v2288
      %v2363 = vunpack.c.h.b16 %v2288
      %v2364 = vunpack.c.l.b16 %v2289
      %v2365 = vunpack.c.h.b16 %v2289
      %v2366 = vunpack.c.l.b16 %v2290
      %v2367 = vunpack.c.h.b16 %v2290
      %v2368 = vunpack.c.l.b16 %v2291
      %v2369 = vunpack.c.h.b16 %v2291
      %v2370 = vunpack.c.l.b16 %v2292
      %v2371 = vunpack.c.h.b16 %v2292
      %v2372 = vunpack.c.l.b16 %v2293
      %v2373 = vunpack.c.h.b16 %v2293
      %v2374 = vunpack.c.l.b16 %v2294
      %v2375 = vunpack.c.h.b16 %v2294
      %v2376 = vunpack.c.l.b16 %v2295
      %v2377 = vunpack.c.h.b16 %v2295
      %v2378 = vunpack.c.l.b16 %v2296
      %v2379 = vunpack.c.h.b16 %v2296
      %v2380 = vunpack.c.l.b16 %v2297
      %v2381 = vunpack.c.h.b16 %v2297
      %v2382 = vunpack.c.l.b16 %v2298
      %v2383 = vunpack.c.h.b16 %v2298
      %v2384 = vunpack.c.l.b16 %v2299
      %v2385 = vunpack.c.h.b16 %v2299
      %v2386 = vunpack.c.l.b16 %v2300
      %v2387 = vunpack.c.h.b16 %v2300
      %v2388 = vunpack.c.l.b16 %v2301
      %v2389 = vunpack.c.h.b16 %v2301
      %v2390 = vunpack.c.l.b16 %v2302
      %v2391 = vunpack.c.h.b16 %v2302
      %v2392 = vunpack.c.l.b16 %v2303
      %v2393 = vunpack.c.h.b16 %v2303
      %v2394 = vunpack.c.l.b16 %v2304
      %v2395 = vunpack.c.h.b16 %v2304
      %v2396 = vunpack.c.l.b16 %v2305
      %v2397 = vunpack.c.h.b16 %v2305
      %v2398 = vunpack.c.l.b16 %v2306
      %v2399 = vunpack.c.h.b16 %v2306
      %v2400 = vunpack.c.l.b16 %v2307
      %v2401 = vunpack.c.h.b16 %v2307
      %v2402 = vunpack.c.l.b16 %v2308
      %v2403 = vunpack.c.h.b16 %v2308
      %v2404 = vunpack.c.l.b16 %v2309
      %v2405 = vunpack.c.h.b16 %v2309
      %v2406 = vpack.c.b16 %v2344, %v2342
      %v2407 = vpack.c.b16 %v2345, %v2343
      %v2408 = vpack.c.b16 %v2348, %v2346
      %v2409 = vpack.c.b16 %v2349, %v2347
      %v2410 = vpack.c.b16 %v2352, %v2350
      %v2411 = vpack.c.b16 %v2353, %v2351
      %v2412 = vpack.c.b16 %v2356, %v2354
      %v2413 = vpack.c.b16 %v2357, %v2355
      %v2414 = vpack.c.b16 %v2360, %v2358
      %v2415 = vpack.c.b16 %v2361, %v2359
      %v2416 = vpack.c.b16 %v2364, %v2362
      %v2417 = vpack.c.b16 %v2365, %v2363
      %v2418 = vpack.c.b16 %v2368, %v2366
      %v2419 = vpack.c.b16 %v2369, %v2367
      %v2420 = vpack.c.b16 %v2372, %v2370
      %v2421 = vpack.c.b16 %v2373, %v2371
      %v2422 = vpack.c.b16 %v2376, %v2374
      %v2423 = vpack.c.b16 %v2377, %v2375
      %v2424 = vpack.c.b16 %v2380, %v2378
      %v2425 = vpack.c.b16 %v2381, %v2379
      %v2426 = vpack.c.b16 %v2384, %v2382
      %v2427 = vpack.c.b16 %v2385, %v2383
      %v2428 = vpack.c.b16 %v2388, %v2386
      %v2429 = vpack.c.b16 %v2389, %v2387
      %v2430 = vpack.c.b16 %v2392, %v2390
      %v2431 = vpack.c.b16 %v2393, %v2391
      %v2432 = vpack.c.b16 %v2396, %v2394
      %v2433 = vpack.c.b16 %v2397, %v2395
      %v2434 = vpack.c.b16 %v2400, %v2398
      %v2435 = vpack.c.b16 %v2401, %v2399
      %v2436 = vpack.c.b16 %v2404, %v2402
      %v2437 = vpack.c.b16 %v2405, %v2403
      %2470 = vmatprep.subr.bf16.mxu0 %v2407
      %2471 = vmatpush1.bf16.msra.mxu0 %v2406
      %2472 = vmatprep.subr.bf16.mxu0 %v2409
      %2473 = vmatpush1.bf16.msra.mxu0 %v2408
      %2474 = vmatprep.subr.bf16.mxu0 %v2411
      %2475 = vmatpush1.bf16.msra.mxu0 %v2410
      %2476 = vmatprep.subr.bf16.mxu0 %v2413
      %2477 = vmatpush1.bf16.msra.mxu0 %v2412
      %2478 = vmatprep.subr.bf16.mxu0 %v2415
      %2479 = vmatpush1.bf16.msra.mxu0 %v2414
      %2480 = vmatprep.subr.bf16.mxu0 %v2417
      %2481 = vmatpush1.bf16.msra.mxu0 %v2416
      %2482 = vmatprep.subr.bf16.mxu0 %v2419
      %2483 = vmatpush1.bf16.msra.mxu0 %v2418
      %2484 = vmatprep.subr.bf16.mxu0 %v2421
      %2485 = vmatpush1.bf16.msra.mxu0 %v2420
      %2486 = vmatprep.subr.bf16.mxu0 %v2423
      %2487 = vmatpush1.bf16.msra.mxu0 %v2422
      %2488 = vmatprep.subr.bf16.mxu0 %v2425
      %2489 = vmatpush1.bf16.msra.mxu0 %v2424
      %2490 = vmatprep.subr.bf16.mxu0 %v2427
      %2491 = vmatpush1.bf16.msra.mxu0 %v2426
      %2492 = vmatprep.subr.bf16.mxu0 %v2429
      %2493 = vmatpush1.bf16.msra.mxu0 %v2428
      %2494 = vmatprep.subr.bf16.mxu0 %v2431
      %2495 = vmatpush1.bf16.msra.mxu0 %v2430
      %2496 = vmatprep.subr.bf16.mxu0 %v2433
      %2497 = vmatpush1.bf16.msra.mxu0 %v2432
      %2498 = vmatprep.subr.bf16.mxu0 %v2435
      %2499 = vmatpush1.bf16.msra.mxu0 %v2434
      %2500 = vmatprep.subr.bf16.mxu0 %v2437
      %2501 = vmatpush1.bf16.msra.mxu0 %v2436
      %2502 = vmatprep.mubr.bf16.mxu0 %v2277
      %2503 = vmatmul.mubr.bf16.gmra.mrb[0].mxu0 %v2276
      %v2504 = vpop.f32.mrb[0].mxu0
      %v2505 = vadd.f32 0.0, %v2504
      %v2506 = vpop.f32.mrb[0].mxu0
      %v2507 = vadd.f32 0.0, %v2506
      %v2508 = vpop.f32.mrb[0].mxu0
      %v2509 = vpop.f32.mrb[0].mxu0
      %2510 = vdwg.mxu0
      %v2511 = vpack.c.bf16 %v2505, %v2505
      %v2512 = vpack.c.bf16 %v2507, %v2507
      %v2513 = vld [vmem:[%s15] sm:$0x3]
      %v2516 = vunpack.c.l.s4 1966171168
      %v2517 = vunpack.c.0.s8 %v2516
      %v2518 = vlaneseq
      %v2519 = vshrl.u32 %v2518, 7
      %v2520 = vsub.s32 %v2517, %v2519
      %v2521 = vrot.slane %v2513, %v2520
      %v2522 = vcombine.high %v2521, %v2521
      %v2524 = vunpack.c.l.s4 1966171168
      %v2525 = vunpack.c.0.s8 %v2524
      %v2526 = vlaneseq
      %v2527 = vshrl.u32 %v2526, 7
      %v2528 = vsub.s32 %v2525, %v2527
      %v2529 = vrot.slane %v2521, %v2528
      %v2531 = vunpack.c.l.s4 1966171168
      %v2532 = vunpack.c.0.s8 %v2531
      %v2533 = vlaneseq
      %v2534 = vshrl.u32 %v2533, 7
      %v2535 = vsub.s32 %v2532, %v2534
      %v2536 = vrot.slane %v2522, %v2535
      %v2538 = vpack.i.b16 %v2529, %v2529
      %v2540 = vlaneseq
      %v2541 = vshrl.u32 %v2540, 7
      %v2542 = vsub.s32 0, %v2541
      %v2543 = vrot.slane %v2538, %v2542
      %v2545 = vpack.i.b16 %v2536, %v2536
      %v2547 = vlaneseq
      %v2548 = vshrl.u32 %v2547, 7
      %v2549 = vsub.s32 0, %v2548
      %v2550 = vrot.slane %v2545, %v2549
      %v2551 = vadd.bf16 %v2511, %v2543
      %v2552 = vadd.bf16 %v2512, %v2550
      %v2553 = vld [vmem:[%s16] sm:$0xf]
      %v2554 = vld [vmem:[%s16 + $0x4] sm:$0xf]
      %v2555 = vld [vmem:[%s16 + $0x8] sm:$0xf]
      %v2556 = vld [vmem:[%s16 + $0xc] sm:$0xf]
      %v2557 = vld [vmem:[%s16 + $0x10] sm:$0xf]
      %v2558 = vld [vmem:[%s16 + $0x14] sm:$0xf]
      %v2559 = vld [vmem:[%s16 + $0x18] sm:$0xf]
      %v2560 = vld [vmem:[%s16 + $0x1c] sm:$0xf]
      %v2561 = vld [vmem:[%s16 + $0x20] sm:$0xf]
      %v2562 = vld [vmem:[%s16 + $0x24] sm:$0xf]
      %v2563 = vld [vmem:[%s16 + $0x28] sm:$0xf]
      %v2564 = vld [vmem:[%s16 + $0x2c] sm:$0xf]
      %v2565 = vld [vmem:[%s16 + $0x30] sm:$0xf]
      %v2566 = vld [vmem:[%s16 + $0x34] sm:$0xf]
      %v2567 = vld [vmem:[%s16 + $0x38] sm:$0xf]
      %v2568 = vld [vmem:[%s16 + $0x3c] sm:$0xf]
      %v2569 = vld [vmem:[%s16 + $0x40] sm:$0xf]
      %v2570 = vld [vmem:[%s16 + $0x44] sm:$0xf]
      %v2571 = vld [vmem:[%s16 + $0x48] sm:$0xf]
      %v2572 = vld [vmem:[%s16 + $0x4c] sm:$0xf]
      %v2573 = vld [vmem:[%s16 + $0x50] sm:$0xf]
      %v2574 = vld [vmem:[%s16 + $0x54] sm:$0xf]
      %v2575 = vld [vmem:[%s16 + $0x58] sm:$0xf]
      %v2576 = vld [vmem:[%s16 + $0x5c] sm:$0xf]
      %v2577 = vld [vmem:[%s16 + $0x60] sm:$0xf]
      %v2578 = vld [vmem:[%s16 + $0x64] sm:$0xf]
      %v2579 = vld [vmem:[%s16 + $0x68] sm:$0xf]
      %v2580 = vld [vmem:[%s16 + $0x6c] sm:$0xf]
      %v2581 = vld [vmem:[%s16 + $0x70] sm:$0xf]
      %v2582 = vld [vmem:[%s16 + $0x74] sm:$0xf]
      %v2583 = vld [vmem:[%s16 + $0x78] sm:$0xf]
      %v2584 = vld [vmem:[%s16 + $0x7c] sm:$0xf]
      %v2617 = vunpack.c.l.b16 %v2553
      %v2618 = vunpack.c.l.b16 %v2554
      %v2619 = vunpack.c.l.b16 %v2555
      %v2620 = vunpack.c.l.b16 %v2556
      %v2621 = vunpack.c.l.b16 %v2557
      %v2622 = vunpack.c.l.b16 %v2558
      %v2623 = vunpack.c.l.b16 %v2559
      %v2624 = vunpack.c.l.b16 %v2560
      %v2625 = vunpack.c.l.b16 %v2561
      %v2626 = vunpack.c.l.b16 %v2562
      %v2627 = vunpack.c.l.b16 %v2563
      %v2628 = vunpack.c.l.b16 %v2564
      %v2629 = vunpack.c.l.b16 %v2565
      %v2630 = vunpack.c.l.b16 %v2566
      %v2631 = vunpack.c.l.b16 %v2567
      %v2632 = vunpack.c.l.b16 %v2568
      %v2633 = vunpack.c.l.b16 %v2569
      %v2634 = vunpack.c.l.b16 %v2570
      %v2635 = vunpack.c.l.b16 %v2571
      %v2636 = vunpack.c.l.b16 %v2572
      %v2637 = vunpack.c.l.b16 %v2573
      %v2638 = vunpack.c.l.b16 %v2574
      %v2639 = vunpack.c.l.b16 %v2575
      %v2640 = vunpack.c.l.b16 %v2576
      %v2641 = vunpack.c.l.b16 %v2577
      %v2642 = vunpack.c.l.b16 %v2578
      %v2643 = vunpack.c.l.b16 %v2579
      %v2644 = vunpack.c.l.b16 %v2580
      %v2645 = vunpack.c.l.b16 %v2581
      %v2646 = vunpack.c.l.b16 %v2582
      %v2647 = vunpack.c.l.b16 %v2583
      %v2648 = vunpack.c.l.b16 %v2584
      %v2649 = vpack.c.b16 %v2618, %v2617
      %v2650 = vpack.c.b16 %v2620, %v2619
      %v2651 = vpack.c.b16 %v2622, %v2621
      %v2652 = vpack.c.b16 %v2624, %v2623
      %v2653 = vpack.c.b16 %v2626, %v2625
      %v2654 = vpack.c.b16 %v2628, %v2627
      %v2655 = vpack.c.b16 %v2630, %v2629
      %v2656 = vpack.c.b16 %v2632, %v2631
      %v2657 = vpack.c.b16 %v2634, %v2633
      %v2658 = vpack.c.b16 %v2636, %v2635
      %v2659 = vpack.c.b16 %v2638, %v2637
      %v2660 = vpack.c.b16 %v2640, %v2639
      %v2661 = vpack.c.b16 %v2642, %v2641
      %v2662 = vpack.c.b16 %v2644, %v2643
      %v2663 = vpack.c.b16 %v2646, %v2645
      %v2664 = vpack.c.b16 %v2648, %v2647
      %2681 = vmatprep.subr.bf16.mxu0 0
      %2682 = vmatpush1.bf16.msra.mxu0 %v2649
      %2683 = vmatprep.subr.bf16.mxu0 0
      %2684 = vmatpush1.bf16.msra.mxu0 %v2650
      %2685 = vmatprep.subr.bf16.mxu0 0
      %2686 = vmatpush1.bf16.msra.mxu0 %v2651
      %2687 = vmatprep.subr.bf16.mxu0 0
      %2688 = vmatpush1.bf16.msra.mxu0 %v2652
      %2689 = vmatprep.subr.bf16.mxu0 0
      %2690 = vmatpush1.bf16.msra.mxu0 %v2653
      %2691 = vmatprep.subr.bf16.mxu0 0
      %2692 = vmatpush1.bf16.msra.mxu0 %v2654
      %2693 = vmatprep.subr.bf16.mxu0 0
      %2694 = vmatpush1.bf16.msra.mxu0 %v2655
      %2695 = vmatprep.subr.bf16.mxu0 0
      %2696 = vmatpush1.bf16.msra.mxu0 %v2656
      %2697 = vmatprep.subr.bf16.mxu0 0
      %2698 = vmatpush1.bf16.msra.mxu0 %v2657
      %2699 = vmatprep.subr.bf16.mxu0 0
      %2700 = vmatpush1.bf16.msra.mxu0 %v2658
      %2701 = vmatprep.subr.bf16.mxu0 0
      %2702 = vmatpush1.bf16.msra.mxu0 %v2659
      %2703 = vmatprep.subr.bf16.mxu0 0
      %2704 = vmatpush1.bf16.msra.mxu0 %v2660
      %2705 = vmatprep.subr.bf16.mxu0 0
      %2706 = vmatpush1.bf16.msra.mxu0 %v2661
      %2707 = vmatprep.subr.bf16.mxu0 0
      %2708 = vmatpush1.bf16.msra.mxu0 %v2662
      %2709 = vmatprep.subr.bf16.mxu0 0
      %2710 = vmatpush1.bf16.msra.mxu0 %v2663
      %2711 = vmatprep.subr.bf16.mxu0 0
      %2712 = vmatpush1.bf16.msra.mxu0 %v2664
      %2713 = vmatprep.mubr.bf16.mxu0 %v2552
      %2714 = vmatmul.mubr.bf16.gmra.mrb[0].mxu0 %v2551
      %v2715 = vpop.f32.mrb[0].mxu0
      %v2716 = vadd.f32 0.0, %v2715
      %v2717 = vpop.f32.mrb[0].mxu0
      %v2718 = vpop.f32.mrb[0].mxu0
      %v2719 = vpop.f32.mrb[0].mxu0
      %2720 = vdwg.mxu0
      %v2721 = vpack.c.bf16 %v2716, %v2716
      %v2722 = vld [vmem:[%s17] sm:$0x1]
      %v2724 = vpack.i.b16 %v2722, %v2722
      %v2726 = vlaneseq
      %v2727 = vshrl.u32 %v2726, 7
      %v2728 = vsub.s32 0, %v2727
      %v2729 = vrot.slane %v2724, %v2728
      %v2730 = vadd.bf16 %v2721, %v2729
      %v2731 = vmax.bf16 %v2730, 0
      %v2732 = vld [vmem:[%s18] sm:$0xf]
      %v2733 = vld [vmem:[%s18 + $0x4] sm:$0xf]
      %v2734 = vld [vmem:[%s18 + $0x8] sm:$0xf]
      %v2735 = vld [vmem:[%s18 + $0xc] sm:$0xf]
      %v2736 = vld [vmem:[%s18 + $0x10] sm:$0xf]
      %v2737 = vld [vmem:[%s18 + $0x14] sm:$0xf]
      %v2738 = vld [vmem:[%s18 + $0x18] sm:$0xf]
      %v2739 = vld [vmem:[%s18 + $0x1c] sm:$0xf]
      %v2740 = vld [vmem:[%s18 + $0x20] sm:$0xf]
      %v2741 = vld [vmem:[%s18 + $0x24] sm:$0xf]
      %v2742 = vld [vmem:[%s18 + $0x28] sm:$0xf]
      %v2743 = vld [vmem:[%s18 + $0x2c] sm:$0xf]
      %v2744 = vld [vmem:[%s18 + $0x30] sm:$0xf]
      %v2745 = vld [vmem:[%s18 + $0x34] sm:$0xf]
      %v2746 = vld [vmem:[%s18 + $0x38] sm:$0xf]
      %v2747 = vld [vmem:[%s18 + $0x3c] sm:$0xf]
      %v2764 = vunpack.c.l.b16 %v2732
      %v2765 = vunpack.c.l.b16 %v2733
      %v2766 = vunpack.c.l.b16 %v2734
      %v2767 = vunpack.c.l.b16 %v2735
      %v2768 = vunpack.c.l.b16 %v2736
      %v2769 = vunpack.c.l.b16 %v2737
      %v2770 = vunpack.c.l.b16 %v2738
      %v2771 = vunpack.c.l.b16 %v2739
      %v2772 = vunpack.c.l.b16 %v2740
      %v2773 = vunpack.c.l.b16 %v2741
      %v2774 = vunpack.c.l.b16 %v2742
      %v2775 = vunpack.c.l.b16 %v2743
      %v2776 = vunpack.c.l.b16 %v2744
      %v2777 = vunpack.c.l.b16 %v2745
      %v2778 = vunpack.c.l.b16 %v2746
      %v2779 = vunpack.c.l.b16 %v2747
      %v2780 = vpack.c.b16 %v2765, %v2764
      %v2781 = vpack.c.b16 %v2767, %v2766
      %v2782 = vpack.c.b16 %v2769, %v2768
      %v2783 = vpack.c.b16 %v2771, %v2770
      %v2784 = vpack.c.b16 %v2773, %v2772
      %v2785 = vpack.c.b16 %v2775, %v2774
      %v2786 = vpack.c.b16 %v2777, %v2776
      %v2787 = vpack.c.b16 %v2779, %v2778
      %2796 = vmatprep.subr.bf16.mxu0 0
      %2797 = vmatpush1.bf16.msra.mxu0 %v2780
      %2798 = vmatprep.subr.bf16.mxu0 0
      %2799 = vmatpush1.bf16.msra.mxu0 %v2781
      %2800 = vmatprep.subr.bf16.mxu0 0
      %2801 = vmatpush1.bf16.msra.mxu0 %v2782
      %2802 = vmatprep.subr.bf16.mxu0 0
      %2803 = vmatpush1.bf16.msra.mxu0 %v2783
      %2804 = vmatprep.subr.bf16.mxu0 0
      %2805 = vmatpush1.bf16.msra.mxu0 %v2784
      %2806 = vmatprep.subr.bf16.mxu0 0
      %2807 = vmatpush1.bf16.msra.mxu0 %v2785
      %2808 = vmatprep.subr.bf16.mxu0 0
      %2809 = vmatpush1.bf16.msra.mxu0 %v2786
      %2810 = vmatprep.subr.bf16.mxu0 0
      %2811 = vmatpush1.bf16.msra.mxu0 %v2787
      %2812 = vmatprep.subr.bf16.mxu0 0
      %2813 = vmatpush1.bf16.msra.mxu0 0
      %2814 = vmatprep.subr.bf16.mxu0 0
      %2815 = vmatpush1.bf16.msra.mxu0 0
      %2816 = vmatprep.subr.bf16.mxu0 0
      %2817 = vmatpush1.bf16.msra.mxu0 0
      %2818 = vmatprep.subr.bf16.mxu0 0
      %2819 = vmatpush1.bf16.msra.mxu0 0
      %2820 = vmatprep.subr.bf16.mxu0 0
      %2821 = vmatpush1.bf16.msra.mxu0 0
      %2822 = vmatprep.subr.bf16.mxu0 0
      %2823 = vmatpush1.bf16.msra.mxu0 0
      %2824 = vmatprep.subr.bf16.mxu0 0
      %2825 = vmatpush1.bf16.msra.mxu0 0
      %2826 = vmatprep.subr.bf16.mxu0 0
      %2827 = vmatpush1.bf16.msra.mxu0 0
      %2828 = vmatprep.mubr.bf16.mxu0 0
      %2829 = vmatmul.mubr.bf16.gmra.mrb[0].mxu0 %v2731
      %v2830 = vpop.f32.mrb[0].mxu0
      %v2831 = vadd.f32 0.0, %v2830
      %v2832 = vpop.f32.mrb[0].mxu0
      %v2833 = vpop.f32.mrb[0].mxu0
      %v2834 = vpop.f32.mrb[0].mxu0
      %2835 = vdwg.mxu0
      %v2836 = vpack.c.bf16 %v2831, %v2831
      %v2837 = vld [vmem:[%s19] sm:$0x1]
      %v2839 = vpack.i.b16 %v2837, %v2837
      %v2841 = vlaneseq
      %v2842 = vshrl.u32 %v2841, 7
      %v2843 = vsub.s32 0, %v2842
      %v2844 = vrot.slane %v2839, %v2843
      %v2845 = vadd.bf16 %v2836, %v2844
      %v2846 = vmax.bf16 %v2845, 0
      %v2847 = vunpack.c.l.bf16 %v2846
      %v2848 = vld [vmem:[%s20] sm:$0x1]
      %v2850 = vlaneseq
      %v2851 = vshrl.u32 %v2850, 7
      %v2852 = vsub.s32 0, %v2851
      %v2853 = vrot.slane %v2848, %v2852
      %v2855 = vmul.f32 %v2847, %v2853
      %vm2856 = vcmask 523264
      %v2857 = vsel %vm2856, %v2855, 0.0
      %2858 = vadd.xlane.f32.xlu0 %v2857
      %v2859 = vpop.xlane.xlu0 %2858
      %v2860 = vld [vmem:[#allocation2] sm:$0x1]
      %v2862 = vlaneseq
      %v2863 = vshrl.u32 %v2862, 7
      %v2864 = vsub.s32 0, %v2863
      %v2865 = vrot.slane %v2860, %v2864
      %v2867 = vadd.f32 %v2859, %v2865
      %v2868 = vmax.f32 %v2867, 0.0
      %vm2869 = vcmask 7168
      %2870 = vst.msk [vmem:[%s680] sm:$0xff] %vm2869, %v2868
      %p2871 = scmp.lt.s32.totalorder %s35, 1
      %s2872 = scalar_select %p2871, %s35, 1
      %s2873 = smul.addr %s2872, 8
      %s2874 = scalar_lea.vmem %s22, %s2873
      // Predicated region
      $region109: #{srrn_pallas.1} parent=107 // pred_check
        %p2875 = pneg %p520
      $region110: #{srrn_pallas.1} parent=107 // pred_check_branch
        %2877 = sbr.rel (%p2875) target = $region112
      $region111: #{srrn_pallas.1} parent=107 // pred_region
        _
      $region112: #{srrn_pallas.1} parent=107 // pred_fallthru
        _
    $region108: #{srrn_pallas.1} parent=5 // pred_fallthru
      _
    %p2878 = scmp.le.s32.totalorder 2, %s30
    // Predicated region
    $region113: #{srrn_pallas.1} parent=5 // pred_check
      %p2879 = pneg %p2878
    $region114: #{srrn_pallas.1} parent=5 // pred_check_branch
      %2881 = sbr.rel (%p2879) target = $region116
    $region115: #{srrn_pallas.1} parent=5 // pred_region
      %s2882 = ssub.s32 %s30, 2
      // Predicated region
      $region117: #{srrn_pallas.1} parent=115 // pred_check
        %p2883 = pneg %p526
      $region118: #{srrn_pallas.1} parent=115 // pred_check_branch
        %2885 = sbr.rel (%p2883) target = $region120
      $region119: #{srrn_pallas.1} parent=115 // pred_region
        %p2886 = scmp.lt.s32.totalorder %s36, 1
        %s2887 = scalar_select %p2886, %s36, 1
        %s2888 = smul.addr %s2887, 8
        %s2889 = scalar_lea.vmem %s22, %s2888
      $region120: #{srrn_pallas.1} parent=115 // pred_fallthru
        _
    $region116: #{srrn_pallas.1} parent=5 // pred_fallthru
      _
  $region6: #{srrn_pallas.1} parent=0 // loop_footer
    %s34 = sadd.s32 1, %s30
  $region7: #{srrn_pallas.1} parent=0 // loop_footer_branch
    %29 = sbr.rel target = $region3
  $region8: #{srrn_pallas.1} parent=0 // loop_exit
    _

</llo_original>
